<compile_context>
chip_gen: v7x
topology: tpu7x:2x2x1
jax: 0.10.0
libtpu: 0.0.40
codegen_flags: <defaults>
</compile_context>

<pallas_src>
import jax
import jax.numpy as jnp
from jax.experimental import pallas as pl
from jax.experimental.pallas import tpu as pltpu


# ---------------------------------------------------------------------------
# Fused Pallas kernel: conv1 + ReLU + conv2 + ReLU + global average pool
# ---------------------------------------------------------------------------

def _fused_cnn_kernel(p1_ref, w1_ref, b1_ref, w2_ref, b2_ref, mask_ref,
                      o_ref, y1pad_ref):
    # p1_ref:   (nb, P1, 9)        conv1 im2col patches (P1 = h1*w1)
    # w1_ref:   (9, C1)            conv1 weights, tap-major (Cin = 1)
    # b1_ref:   (1, C1)
    # w2_ref:   (9, C1, C2)        conv2 weights per tap
    # b2_ref:   (1, C2)
    # mask_ref: (P1, 1)            1/(h2*w2) at even (row,col) positions, else 0
    # o_ref:    (nb, 1, C2)        pooled output
    # y1pad_ref:(nb, h1+2, w1+2, C1)  VMEM scratch holding padded conv1 output
    nb, P1, K1 = p1_ref.shape
    h1 = y1pad_ref.shape[1] - 2
    w1 = y1pad_ref.shape[2] - 2
    C1 = y1pad_ref.shape[3]
    C2 = o_ref.shape[2]
    M = nb * h1 * w1                       # == nb * P1

    # ---- conv1 + ReLU : one MXU matmul over all images in the block ----
    p1 = p1_ref[...].reshape(nb * P1, K1)                      # (M, 9)
    y1 = jnp.dot(p1, w1_ref[...], preferred_element_type=jnp.float32)
    y1 = jnp.maximum(y1 + b1_ref[...], 0.0)                    # (M, C1)

    # ---- keep conv1 activation resident in zero-padded VMEM scratch ----
    y1pad_ref[...] = jnp.zeros_like(y1pad_ref)
    y1pad_ref[:, 1:1 + h1, 1:1 + w1, :] = y1.reshape(nb, h1, w1, C1)

    # ---- conv2 + ReLU : 9 accumulating tap-wise dots, contiguous slices ----
    acc = jnp.zeros((M, C2), jnp.float32)
    for kh in range(3):
        for kw in range(3):
            t = y1pad_ref[:, kh:kh + h1, kw:kw + w1, :]        # (nb, h1, w1, C1)
            acc = acc + jnp.dot(t.reshape(M, C1), w2_ref[kh * 3 + kw],
                                preferred_element_type=jnp.float32)
    z = jnp.maximum(acc + b2_ref[...], 0.0)                    # (M, C2)

    # ---- stride-2 sampling + AdaptiveAvgPool2d((1,1)) as a mask-sum ----
    z3 = z.reshape(nb, h1 * w1, C2)                            # (nb, P1, C2)
    pooled = jnp.sum(z3 * mask_ref[...][None, :, :], axis=1)   # (nb, C2)
    o_ref[...] = pooled[:, None, :]


# ---------------------------------------------------------------------------
# Parameter prep (hoisted out of the forward pass; run once)
# ---------------------------------------------------------------------------

def prepare_params(params):
    """Pack torch-layout params for the fused kernel (call once, reuse)."""
    w1, b1, w2, b2 = params            # (32,1,3,3), (32,), (64,32,3,3), (64,)
    C1, C2 = w1.shape[0], w2.shape[0]
    # conv1: (Cout, 1, kh, kw) -> (kh*3+kw, Cout)
    w1p = jnp.transpose(w1, (2, 3, 1, 0)).reshape(9, C1)
    b1p = b1.reshape(1, C1)
    # conv2: (Cout, Cin, kh, kw) -> (kh*3+kw, Cin, Cout)
    w2p = jnp.transpose(w2, (2, 3, 1, 0)).reshape(9, C1, C2)
    b2p = b2.reshape(1, C2)
    return w1p, b1p, w2p, b2p


def _pick_block_n(n):
    """Images per grid step: batch up work but keep >=2 programs for v7x."""
    for d in (8, 4, 2, 1):
        if n % d == 0 and (n // d) >= 2:
            return d
    return 1


# ---------------------------------------------------------------------------
# Forward pass wrapper
# ---------------------------------------------------------------------------

def scratch_cnn_forward(x, packed):
    """x: (N, 1, H, W) float32 (NCHW). packed = prepare_params(params). -> (N, 64)."""
    w1p, b1p, w2p, b2p = packed
    N, cin, H, W = x.shape
    assert cin == 1
    C1, C2 = w1p.shape[1], w2p.shape[2]
    h1 = (H + 2 - 3) // 2 + 1
    w1s = (W + 2 - 3) // 2 + 1
    h2 = (h1 + 2 - 3) // 2 + 1
    w2s = (w1s + 2 - 3) // 2 + 1
    P1 = h1 * w1s

    # conv1 patch extraction (tiny XLA glue: Cin=1 so p1 is only (N, P1, 9) f32;
    # it is read exactly once by the fused kernel).
    xpad = jnp.pad(x[:, 0], ((0, 0), (1, 1), (1, 1)))           # (N, H+2, W+2)
    cols = []
    for kh in range(3):
        for kw in range(3):
            s = xpad[:, kh:kh + 2 * h1:2, kw:kw + 2 * w1s:2]    # (N, h1, w1s)
            cols.append(s.reshape(N, P1))
    p1 = jnp.stack(cols, axis=-1)                               # (N, P1, 9)

    # Pool mask: even (row, col) stride-1 positions == the stride-2 conv2
    # outputs, pre-scaled by 1/(h2*w2) so the kernel does a single mask-sum.
    rr = (jnp.arange(h1) % 2 == 0)
    cc = (jnp.arange(w1s) % 2 == 0)
    keep = (rr[:, None] & cc[None, :]).astype(jnp.float32) / float(h2 * w2s)
    pool_mask = keep.reshape(P1, 1)

    block_n = _pick_block_n(N)
    grid = (N // block_n,)

    out = pl.pallas_call(
        _fused_cnn_kernel,
        out_shape=jax.ShapeDtypeStruct((N, 1, C2), jnp.float32),
        grid=grid,
        in_specs=[
            pl.BlockSpec((block_n, P1, 9), lambda n: (n, 0, 0)),
            pl.BlockSpec((9, C1), lambda n: (0, 0)),
            pl.BlockSpec((1, C1), lambda n: (0, 0)),
            pl.BlockSpec((9, C1, C2), lambda n: (0, 0, 0)),
            pl.BlockSpec((1, C2), lambda n: (0, 0)),
            pl.BlockSpec((P1, 1), lambda n: (0, 0)),
        ],
        out_specs=pl.BlockSpec((block_n, 1, C2), lambda n: (n, 0, 0)),
        scratch_shapes=[
            pltpu.VMEM((block_n, h1 + 2, w1s + 2, C1), jnp.float32),
        ],
        compiler_params=pltpu.CompilerParams(
            dimension_semantics=("parallel",)),
    )(p1, w1p, b1p, w2p, b2p, pool_mask)
    return out.reshape(N, C2)


# ---------------------------------------------------------------------------
# Pure-JAX reference (mirrors the PyTorch module exactly)
# ---------------------------------------------------------------------------

def reference_forward(x, params):
    w1, b1, w2, b2 = params
    dn = ('NCHW', 'OIHW', 'NCHW')
    y = jax.lax.conv_general_dilated(x, w1, (2, 2), ((1, 1), (1, 1)),
                                     dimension_numbers=dn)
    y = jax.nn.relu(y + b1[None, :, None, None])
    y = jax.lax.conv_general_dilated(y, w2, (2, 2), ((1, 1), (1, 1)),
                                     dimension_numbers=dn)
    y = jax.nn.relu(y + b2[None, :, None, None])
    return jnp.mean(y, axis=(2, 3))                             # (N, 64) == flatten


# ---------------------------------------------------------------------------
# Main
# ---------------------------------------------------------------------------

if __name__ == "__main__":
    key = jax.random.PRNGKey(0)
    kx, k1, k2, k3, k4 = jax.random.split(key, 5)

    # Deterministic synthetic parameters (shapes from the module's __init__).
    w1 = jax.random.normal(k1, (32, 1, 3, 3), jnp.float32) * 0.2
    b1 = jax.random.normal(k2, (32,), jnp.float32) * 0.1
    w2 = jax.random.normal(k3, (64, 32, 3, 3), jnp.float32) * 0.05
    b2 = jax.random.normal(k4, (64,), jnp.float32) * 0.1
    params = (w1, b1, w2, b2)

    # Small NCHW input consistent with Conv2d(1, ...): batch=2, 1 channel, 16x16.
    x = jax.random.normal(kx, (2, 1, 16, 16), jnp.float32)

    packed = prepare_params(params)             # one-time weight repacking
    fwd = jax.jit(scratch_cnn_forward)

    out = fwd(x, packed)
    out = jax.block_until_ready(out)

    ref = reference_forward(x, params)
    assert out.shape == (2, 64)
    assert jnp.allclose(out, ref, rtol=1e-4, atol=1e-4), (
        f"max abs err {jnp.max(jnp.abs(out - ref))}")

    print("KERNEL_OK")
</pallas_src>

<mosaic_0001>
module attributes {stable_mosaic.version = 11 : i64} {
  func.func @_fused_cnn_kernel(%arg0: i32, %arg1: memref<1x64x9xf32, #tpu.memory_space<vmem>>, %arg2: memref<9x32xf32, #tpu.memory_space<vmem>>, %arg3: memref<1x32xf32, #tpu.memory_space<vmem>>, %arg4: memref<9x32x64xf32, #tpu.memory_space<vmem>>, %arg5: memref<1x64xf32, #tpu.memory_space<vmem>>, %arg6: memref<64x1xf32, #tpu.memory_space<vmem>>, %arg7: memref<1x1x64xf32, #tpu.memory_space<vmem>>, %arg8: memref<1x10x10x32xf32, #tpu.memory_space<vmem>>) attributes {dimension_semantics = [#tpu.dimension_semantics<parallel>], iteration_bounds = array<i64: 2>, scalar_prefetch = 0 : i64, scratch_operands = 1 : i64, tpu.core_type = #tpu.core_type<tc>, window_params = [{transform_indices = @transform_0, window_bounds = array<i64: 1, 64, 9>}, {pipeline_mode = #tpu.pipeline_mode<synchronous>, transform_indices = @transform_1, window_bounds = array<i64: 9, 32>}, {pipeline_mode = #tpu.pipeline_mode<synchronous>, transform_indices = @transform_2, window_bounds = array<i64: 1, 32>}, {pipeline_mode = #tpu.pipeline_mode<synchronous>, transform_indices = @transform_3, window_bounds = array<i64: 9, 32, 64>}, {pipeline_mode = #tpu.pipeline_mode<synchronous>, transform_indices = @transform_4, window_bounds = array<i64: 1, 64>}, {pipeline_mode = #tpu.pipeline_mode<synchronous>, transform_indices = @transform_5, window_bounds = array<i64: 64, 1>}, {transform_indices = @transform_6, window_bounds = array<i64: 1, 1, 64>}]} {
    %c0 = arith.constant 0 : index
    %c0_0 = arith.constant 0 : index
    %c0_1 = arith.constant 0 : index
    %0 = vector.load %arg1[%c0, %c0_0, %c0_1] : memref<1x64x9xf32, #tpu.memory_space<vmem>>, vector<1x64x9xf32>
    %1 = vector.shape_cast %0 : vector<1x64x9xf32> to vector<64x9xf32>
    %c0_2 = arith.constant 0 : index
    %c0_3 = arith.constant 0 : index
    %2 = vector.load %arg2[%c0_2, %c0_3] : memref<9x32xf32, #tpu.memory_space<vmem>>, vector<9x32xf32>
    %cst = arith.constant dense<0.000000e+00> : vector<64x32xf32>
    %3 = tpu.matmul %1, %2, %cst {dimension_numbers = #tpu.dot_dimension_numbers<[1], [0], [0], [1], [0, 0, 1, 1], [], []>} : vector<64x9xf32>, vector<9x32xf32>, vector<64x32xf32> -> vector<64x32xf32>
    %c0_4 = arith.constant 0 : index
    %c0_5 = arith.constant 0 : index
    %4 = vector.load %arg3[%c0_4, %c0_5] : memref<1x32xf32, #tpu.memory_space<vmem>>, vector<1x32xf32>
    %5 = vector.broadcast %4 : vector<1x32xf32> to vector<64x32xf32>
    %6 = arith.addf %3, %5 : vector<64x32xf32>
    %cst_6 = arith.constant 0.000000e+00 : f32
    %7 = vector.broadcast %cst_6 : f32 to vector<64x32xf32>
    %8 = arith.maximumf %6, %7 : vector<64x32xf32>
    %cst_7 = arith.constant 0.000000e+00 : f32
    %9 = vector.broadcast %cst_7 : f32 to vector<1x10x10x32xf32>
    %c0_8 = arith.constant 0 : index
    %c0_9 = arith.constant 0 : index
    %c0_10 = arith.constant 0 : index
    %c0_11 = arith.constant 0 : index
    %10 = vector.load %arg8[%c0_8, %c0_9, %c0_10, %c0_11] : memref<1x10x10x32xf32, #tpu.memory_space<vmem>>, vector<1x10x10x32xf32>
    tpu.vector_store %arg8[%c0_8, %c0_9, %c0_10, %c0_11], %9 {strides = array<i32>} : memref<1x10x10x32xf32, #tpu.memory_space<vmem>>, vector<1x10x10x32xf32>,
    %11 = vector.shape_cast %8 : vector<64x32xf32> to vector<1x8x8x32xf32>
    %c0_12 = arith.constant 0 : index
    %c1 = arith.constant 1 : index
    %c1_13 = arith.constant 1 : index
    %c0_14 = arith.constant 0 : index
    %12 = vector.load %arg8[%c0_12, %c1, %c1_13, %c0_14] : memref<1x10x10x32xf32, #tpu.memory_space<vmem>>, vector<1x8x8x32xf32>
    tpu.vector_store %arg8[%c0_12, %c1, %c1_13, %c0_14], %11 {strides = array<i32>} : memref<1x10x10x32xf32, #tpu.memory_space<vmem>>, vector<1x8x8x32xf32>,
    %cst_15 = arith.constant 0.000000e+00 : f32
    %13 = vector.broadcast %cst_15 : f32 to vector<64x64xf32>
    %c0_16 = arith.constant 0 : index
    %c0_17 = arith.constant 0 : index
    %c0_18 = arith.constant 0 : index
    %c0_19 = arith.constant 0 : index
    %14 = vector.load %arg8[%c0_16, %c0_17, %c0_18, %c0_19] : memref<1x10x10x32xf32, #tpu.memory_space<vmem>>, vector<1x8x8x32xf32>
    %15 = vector.shape_cast %14 : vector<1x8x8x32xf32> to vector<64x32xf32>
    %c0_20 = arith.constant 0 : index
    %c0_21 = arith.constant 0 : index
    %c0_22 = arith.constant 0 : index
    %16 = vector.load %arg4[%c0_20, %c0_21, %c0_22] : memref<9x32x64xf32, #tpu.memory_space<vmem>>, vector<1x32x64xf32>
    %17 = vector.shape_cast %16 : vector<1x32x64xf32> to vector<32x64xf32>
    %cst_23 = arith.constant dense<0.000000e+00> : vector<64x64xf32>
    %18 = tpu.matmul %15, %17, %cst_23 {dimension_numbers = #tpu.dot_dimension_numbers<[1], [0], [0], [1], [0, 0, 1, 1], [], []>} : vector<64x32xf32>, vector<32x64xf32>, vector<64x64xf32> -> vector<64x64xf32>
    %19 = arith.addf %13, %18 : vector<64x64xf32>
    %c0_24 = arith.constant 0 : index
    %c0_25 = arith.constant 0 : index
    %c1_26 = arith.constant 1 : index
    %c0_27 = arith.constant 0 : index
    %20 = vector.load %arg8[%c0_24, %c0_25, %c1_26, %c0_27] : memref<1x10x10x32xf32, #tpu.memory_space<vmem>>, vector<1x8x8x32xf32>
    %21 = vector.shape_cast %20 : vector<1x8x8x32xf32> to vector<64x32xf32>
    %c1_28 = arith.constant 1 : index
    %c0_29 = arith.constant 0 : index
    %c0_30 = arith.constant 0 : index
    %22 = vector.load %arg4[%c1_28, %c0_29, %c0_30] : memref<9x32x64xf32, #tpu.memory_space<vmem>>, vector<1x32x64xf32>
    %23 = vector.shape_cast %22 : vector<1x32x64xf32> to vector<32x64xf32>
    %cst_31 = arith.constant dense<0.000000e+00> : vector<64x64xf32>
    %24 = tpu.matmul %21, %23, %cst_31 {dimension_numbers = #tpu.dot_dimension_numbers<[1], [0], [0], [1], [0, 0, 1, 1], [], []>} : vector<64x32xf32>, vector<32x64xf32>, vector<64x64xf32> -> vector<64x64xf32>
    %25 = arith.addf %19, %24 : vector<64x64xf32>
    %c0_32 = arith.constant 0 : index
    %c0_33 = arith.constant 0 : index
    %c2 = arith.constant 2 : index
    %c0_34 = arith.constant 0 : index
    %26 = vector.load %arg8[%c0_32, %c0_33, %c2, %c0_34] : memref<1x10x10x32xf32, #tpu.memory_space<vmem>>, vector<1x8x8x32xf32>
    %27 = vector.shape_cast %26 : vector<1x8x8x32xf32> to vector<64x32xf32>
    %c2_35 = arith.constant 2 : index
    %c0_36 = arith.constant 0 : index
    %c0_37 = arith.constant 0 : index
    %28 = vector.load %arg4[%c2_35, %c0_36, %c0_37] : memref<9x32x64xf32, #tpu.memory_space<vmem>>, vector<1x32x64xf32>
    %29 = vector.shape_cast %28 : vector<1x32x64xf32> to vector<32x64xf32>
    %cst_38 = arith.constant dense<0.000000e+00> : vector<64x64xf32>
    %30 = tpu.matmul %27, %29, %cst_38 {dimension_numbers = #tpu.dot_dimension_numbers<[1], [0], [0], [1], [0, 0, 1, 1], [], []>} : vector<64x32xf32>, vector<32x64xf32>, vector<64x64xf32> -> vector<64x64xf32>
    %31 = arith.addf %25, %30 : vector<64x64xf32>
    %c0_39 = arith.constant 0 : index
    %c1_40 = arith.constant 1 : index
    %c0_41 = arith.constant 0 : index
    %c0_42 = arith.constant 0 : index
    %32 = vector.load %arg8[%c0_39, %c1_40, %c0_41, %c0_42] : memref<1x10x10x32xf32, #tpu.memory_space<vmem>>, vector<1x8x8x32xf32>
    %33 = vector.shape_cast %32 : vector<1x8x8x32xf32> to vector<64x32xf32>
    %c3 = arith.constant 3 : index
    %c0_43 = arith.constant 0 : index
    %c0_44 = arith.constant 0 : index
    %34 = vector.load %arg4[%c3, %c0_43, %c0_44] : memref<9x32x64xf32, #tpu.memory_space<vmem>>, vector<1x32x64xf32>
    %35 = vector.shape_cast %34 : vector<1x32x64xf32> to vector<32x64xf32>
    %cst_45 = arith.constant dense<0.000000e+00> : vector<64x64xf32>
    %36 = tpu.matmul %33, %35, %cst_45 {dimension_numbers = #tpu.dot_dimension_numbers<[1], [0], [0], [1], [0, 0, 1, 1], [], []>} : vector<64x32xf32>, vector<32x64xf32>, vector<64x64xf32> -> vector<64x64xf32>
    %37 = arith.addf %31, %36 : vector<64x64xf32>
    %c0_46 = arith.constant 0 : index
    %c1_47 = arith.constant 1 : index
    %c1_48 = arith.constant 1 : index
    %c0_49 = arith.constant 0 : index
    %38 = vector.load %arg8[%c0_46, %c1_47, %c1_48, %c0_49] : memref<1x10x10x32xf32, #tpu.memory_space<vmem>>, vector<1x8x8x32xf32>
    %39 = vector.shape_cast %38 : vector<1x8x8x32xf32> to vector<64x32xf32>
    %c4 = arith.constant 4 : index
    %c0_50 = arith.constant 0 : index
    %c0_51 = arith.constant 0 : index
    %40 = vector.load %arg4[%c4, %c0_50, %c0_51] : memref<9x32x64xf32, #tpu.memory_space<vmem>>, vector<1x32x64xf32>
    %41 = vector.shape_cast %40 : vector<1x32x64xf32> to vector<32x64xf32>
    %cst_52 = arith.constant dense<0.000000e+00> : vector<64x64xf32>
    %42 = tpu.matmul %39, %41, %cst_52 {dimension_numbers = #tpu.dot_dimension_numbers<[1], [0], [0], [1], [0, 0, 1, 1], [], []>} : vector<64x32xf32>, vector<32x64xf32>, vector<64x64xf32> -> vector<64x64xf32>
    %43 = arith.addf %37, %42 : vector<64x64xf32>
    %c0_53 = arith.constant 0 : index
    %c1_54 = arith.constant 1 : index
    %c2_55 = arith.constant 2 : index
    %c0_56 = arith.constant 0 : index
    %44 = vector.load %arg8[%c0_53, %c1_54, %c2_55, %c0_56] : memref<1x10x10x32xf32, #tpu.memory_space<vmem>>, vector<1x8x8x32xf32>
    %45 = vector.shape_cast %44 : vector<1x8x8x32xf32> to vector<64x32xf32>
    %c5 = arith.constant 5 : index
    %c0_57 = arith.constant 0 : index
    %c0_58 = arith.constant 0 : index
    %46 = vector.load %arg4[%c5, %c0_57, %c0_58] : memref<9x32x64xf32, #tpu.memory_space<vmem>>, vector<1x32x64xf32>
    %47 = vector.shape_cast %46 : vector<1x32x64xf32> to vector<32x64xf32>
    %cst_59 = arith.constant dense<0.000000e+00> : vector<64x64xf32>
    %48 = tpu.matmul %45, %47, %cst_59 {dimension_numbers = #tpu.dot_dimension_numbers<[1], [0], [0], [1], [0, 0, 1, 1], [], []>} : vector<64x32xf32>, vector<32x64xf32>, vector<64x64xf32> -> vector<64x64xf32>
    %49 = arith.addf %43, %48 : vector<64x64xf32>
    %c0_60 = arith.constant 0 : index
    %c2_61 = arith.constant 2 : index
    %c0_62 = arith.constant 0 : index
    %c0_63 = arith.constant 0 : index
    %50 = vector.load %arg8[%c0_60, %c2_61, %c0_62, %c0_63] : memref<1x10x10x32xf32, #tpu.memory_space<vmem>>, vector<1x8x8x32xf32>
    %51 = vector.shape_cast %50 : vector<1x8x8x32xf32> to vector<64x32xf32>
    %c6 = arith.constant 6 : index
    %c0_64 = arith.constant 0 : index
    %c0_65 = arith.constant 0 : index
    %52 = vector.load %arg4[%c6, %c0_64, %c0_65] : memref<9x32x64xf32, #tpu.memory_space<vmem>>, vector<1x32x64xf32>
    %53 = vector.shape_cast %52 : vector<1x32x64xf32> to vector<32x64xf32>
    %cst_66 = arith.constant dense<0.000000e+00> : vector<64x64xf32>
    %54 = tpu.matmul %51, %53, %cst_66 {dimension_numbers = #tpu.dot_dimension_numbers<[1], [0], [0], [1], [0, 0, 1, 1], [], []>} : vector<64x32xf32>, vector<32x64xf32>, vector<64x64xf32> -> vector<64x64xf32>
    %55 = arith.addf %49, %54 : vector<64x64xf32>
    %c0_67 = arith.constant 0 : index
    %c2_68 = arith.constant 2 : index
    %c1_69 = arith.constant 1 : index
    %c0_70 = arith.constant 0 : index
    %56 = vector.load %arg8[%c0_67, %c2_68, %c1_69, %c0_70] : memref<1x10x10x32xf32, #tpu.memory_space<vmem>>, vector<1x8x8x32xf32>
    %57 = vector.shape_cast %56 : vector<1x8x8x32xf32> to vector<64x32xf32>
    %c7 = arith.constant 7 : index
    %c0_71 = arith.constant 0 : index
    %c0_72 = arith.constant 0 : index
    %58 = vector.load %arg4[%c7, %c0_71, %c0_72] : memref<9x32x64xf32, #tpu.memory_space<vmem>>, vector<1x32x64xf32>
    %59 = vector.shape_cast %58 : vector<1x32x64xf32> to vector<32x64xf32>
    %cst_73 = arith.constant dense<0.000000e+00> : vector<64x64xf32>
    %60 = tpu.matmul %57, %59, %cst_73 {dimension_numbers = #tpu.dot_dimension_numbers<[1], [0], [0], [1], [0, 0, 1, 1], [], []>} : vector<64x32xf32>, vector<32x64xf32>, vector<64x64xf32> -> vector<64x64xf32>
    %61 = arith.addf %55, %60 : vector<64x64xf32>
    %c0_74 = arith.constant 0 : index
    %c2_75 = arith.constant 2 : index
    %c2_76 = arith.constant 2 : index
    %c0_77 = arith.constant 0 : index
    %62 = vector.load %arg8[%c0_74, %c2_75, %c2_76, %c0_77] : memref<1x10x10x32xf32, #tpu.memory_space<vmem>>, vector<1x8x8x32xf32>
    %63 = vector.shape_cast %62 : vector<1x8x8x32xf32> to vector<64x32xf32>
    %c8 = arith.constant 8 : index
    %c0_78 = arith.constant 0 : index
    %c0_79 = arith.constant 0 : index
    %64 = vector.load %arg4[%c8, %c0_78, %c0_79] : memref<9x32x64xf32, #tpu.memory_space<vmem>>, vector<1x32x64xf32>
    %65 = vector.shape_cast %64 : vector<1x32x64xf32> to vector<32x64xf32>
    %cst_80 = arith.constant dense<0.000000e+00> : vector<64x64xf32>
    %66 = tpu.matmul %63, %65, %cst_80 {dimension_numbers = #tpu.dot_dimension_numbers<[1], [0], [0], [1], [0, 0, 1, 1], [], []>} : vector<64x32xf32>, vector<32x64xf32>, vector<64x64xf32> -> vector<64x64xf32>
    %67 = arith.addf %61, %66 : vector<64x64xf32>
    %c0_81 = arith.constant 0 : index
    %c0_82 = arith.constant 0 : index
    %68 = vector.load %arg5[%c0_81, %c0_82] : memref<1x64xf32, #tpu.memory_space<vmem>>, vector<1x64xf32>
    %69 = vector.broadcast %68 : vector<1x64xf32> to vector<64x64xf32>
    %70 = arith.addf %67, %69 : vector<64x64xf32>
    %cst_83 = arith.constant 0.000000e+00 : f32
    %71 = vector.broadcast %cst_83 : f32 to vector<64x64xf32>
    %72 = arith.maximumf %70, %71 : vector<64x64xf32>
    %73 = vector.shape_cast %72 : vector<64x64xf32> to vector<1x64x64xf32>
    %c0_84 = arith.constant 0 : index
    %c0_85 = arith.constant 0 : index
    %74 = vector.load %arg6[%c0_84, %c0_85] : memref<64x1xf32, #tpu.memory_space<vmem>>, vector<64x1xf32>
    %75 = vector.shape_cast %74 : vector<64x1xf32> to vector<1x64x1xf32>
    %76 = vector.broadcast %75 : vector<1x64x1xf32> to vector<1x64x64xf32>
    %77 = arith.mulf %73, %76 : vector<1x64x64xf32>
    %cst_86 = arith.constant dense<0.000000e+00> : vector<1x64xf32>
    %78 = vector.multi_reduction <add>, %77, %cst_86 [1] : vector<1x64x64xf32> to vector<1x64xf32>
    %79 = vector.shape_cast %78 : vector<1x64xf32> to vector<1x1x64xf32>
    %c0_87 = arith.constant 0 : index
    %c0_88 = arith.constant 0 : index
    %c0_89 = arith.constant 0 : index
    %80 = vector.load %arg7[%c0_87, %c0_88, %c0_89] : memref<1x1x64xf32, #tpu.memory_space<vmem>>, vector<1x1x64xf32>
    tpu.vector_store %arg7[%c0_87, %c0_88, %c0_89], %79 {strides = array<i32>} : memref<1x1x64xf32, #tpu.memory_space<vmem>>, vector<1x1x64xf32>,
    return
  }
  func.func @transform_0(%arg0: i32) -> (i32, i32, i32) {
    %c0_i32 = arith.constant 0 : i32
    %c0_i32_0 = arith.constant 0 : i32
    %c0_i32_1 = arith.constant 0 : i32
    return %arg0, %c0_i32, %c0_i32_0 : i32, i32, i32
  }
  func.func @transform_1(%arg0: i32) -> (i32, i32) {
    %c0_i32 = arith.constant 0 : i32
    %c0_i32_0 = arith.constant 0 : i32
    %c0_i32_1 = arith.constant 0 : i32
    return %c0_i32, %c0_i32_0 : i32, i32
  }
  func.func @transform_2(%arg0: i32) -> (i32, i32) {
    %c0_i32 = arith.constant 0 : i32
    %c0_i32_0 = arith.constant 0 : i32
    %c0_i32_1 = arith.constant 0 : i32
    return %c0_i32, %c0_i32_0 : i32, i32
  }
  func.func @transform_3(%arg0: i32) -> (i32, i32, i32) {
    %c0_i32 = arith.constant 0 : i32
    %c0_i32_0 = arith.constant 0 : i32
    %c0_i32_1 = arith.constant 0 : i32
    %c0_i32_2 = arith.constant 0 : i32
    return %c0_i32, %c0_i32_0, %c0_i32_1 : i32, i32, i32
  }
  func.func @transform_4(%arg0: i32) -> (i32, i32) {
    %c0_i32 = arith.constant 0 : i32
    %c0_i32_0 = arith.constant 0 : i32
    %c0_i32_1 = arith.constant 0 : i32
    return %c0_i32, %c0_i32_0 : i32, i32
  }
  func.func @transform_5(%arg0: i32) -> (i32, i32) {
    %c0_i32 = arith.constant 0 : i32
    %c0_i32_0 = arith.constant 0 : i32
    %c0_i32_1 = arith.constant 0 : i32
    return %c0_i32, %c0_i32_0 : i32, i32
  }
  func.func @transform_6(%arg0: i32) -> (i32, i32, i32) {
    %c0_i32 = arith.constant 0 : i32
    %c0_i32_0 = arith.constant 0 : i32
    %c0_i32_1 = arith.constant 0 : i32
    return %arg0, %c0_i32, %c0_i32_0 : i32, i32, i32
  }
}

</mosaic_0001>

<llo_original>
// kernel: scratch_cnn_forward.1
$region0: #{scratch_cnn_forward.1}
  #allocation0 [shape = 'u32[]', space=smem, size = 0x4, offset = 0x4, fixed_abs, tag = 'smem constant byte address 0x4 - core index']
  #allocation1 [shape = 'u32[144,128]{1,0:T(1,128)}', space=vmem, size = 0x12000, scoped, tag = 'internal scratch']
  #allocation2 [shape = 'f32[1,10,10,32]{3,2,1,0:T(8,128)}', space=vmem, size = 0x14000, scoped, tag = 'scratch operand']
  %s0 = inlined_call_operand.vmem [shape: f32[2,64,9], index: 0, kind: input, shape index: {}]
  %s1 = inlined_call_operand.vmem [shape: f32[9,32], index: 1, kind: input, shape index: {}]
  %s2 = inlined_call_operand.vmem [shape: f32[1,32], index: 2, kind: input, shape index: {}]
  %s3 = inlined_call_operand.vmem [shape: f32[9,32,64], index: 3, kind: input, shape index: {}]
  %s4 = inlined_call_operand.vmem [shape: f32[1,64], index: 4, kind: input, shape index: {}]
  %s5 = inlined_call_operand.vmem [shape: f32[64,1], index: 5, kind: input, shape index: {}]
  %s6 = inlined_call_operand.hbm [shape: f32[2,1,64], index: 6, kind: output, shape index: {}]
  %s7 = sld [smem:[#allocation0]]
  $region57: #{scratch_cnn_forward.1} parent=0
    _
  %s9 = ssub.s32 1, %s7
  %s10 = scalar_select 0, %s9, %s7
  $region1: #{scratch_cnn_forward.1} parent=0
    #allocation3 [shape = 'u8[1024]{0}', space=vmem, size = 0x400, scoped, tag = 'output window, operand 0']
    #allocation4 [shape = 's32[2]{0}', space=sflag, size = 0x8, scoped, tag = 'scoped memory for scratch_cnn_forward.1']
    %11 = vsyncpa [#allocation4], 0
    %s12 = scalar_lea.sflag [#allocation4], 1
    %13 = vsyncpa %s12, 0
    loop: start=0, step=1, limit=4
    $region2: #{scratch_cnn_forward.1} parent=1 // loop_pre_header
      _
    $region3: #{scratch_cnn_forward.1} parent=1 // loop_header
      %s15 = sphi 0, %s19
      %p16 = scmp.ge.s32.totalorder %s15, 4
      %s25 = sphi 0, %s27
      %s28 = sphi 0, %s25
      %s29 = sphi 0, %s28
      %s45 = sphi 0, %s29
      %s49 = sphi 0, %s49
      %s51 = sphi 0, %s49
      %s52 = sphi 0, %s51
      %s66 = sphi 0, %s52
      %s70 = sphi 0, %s70
      %s72 = sphi 0, %s70
      %s73 = sphi 0, %s72
      %s87 = sphi 0, %s73
      %s91 = sphi 0, %s91
      %s93 = sphi 0, %s91
      %s94 = sphi 0, %s93
      %s108 = sphi 0, %s94
      %s112 = sphi 0, %s112
      %s114 = sphi 0, %s112
      %s115 = sphi 0, %s114
      %s129 = sphi 0, %s115
      %s133 = sphi 0, %s133
      %s135 = sphi 0, %s133
      %s136 = sphi 0, %s135
      %s150 = sphi 0, %s136
      %s156 = sphi 0, %s158
      %s159 = sphi 0, %s156
      %s160 = sphi 0, %s159
      %s176 = sphi 0, %s160
    $region4: #{scratch_cnn_forward.1} parent=1 // loop_header_branch
      %18 = sbr.rel (%p16) target = $region8
    $region5: #{scratch_cnn_forward.1} parent=1 // loop_body
      %s20 = ssub.s32 %s15, 1
      %s21 = ssub.s32 %s15, 2
      %s22 = sadd.s32 %s15, 1
      %s23 = ssub.s32 %s15, %s22
      %p24 = scmp.eq.s32.totalorder %s23, 0
      %s26 = sadd.s32 %s25, 1
      %s27 = scalar_select %p24, %s25, %s26
      %p30 = pneg %p24
      %p31 = scmp.eq.s32.totalorder %s15, 1
      %p32 = por %p30, %p31
      %p33 = scmp.ne.s32.totalorder %s25, %s28
      %p34 = scmp.eq.s32.totalorder %s15, 0
      %p35 = por %p33, %p34
      %p36 = scmp.ne.s32.totalorder %s25, %s28
      %p37 = scmp.eq.s32.totalorder %s20, 1
      %p38 = por %p36, %p37
      %p39 = scmp.ne.s32.totalorder %s28, %s29
      %p40 = scmp.eq.s32.totalorder %s20, 0
      %p41 = por %p39, %p40
      %p42 = scmp.ne.s32.totalorder %s28, %s29
      %p43 = scmp.eq.s32.totalorder %s21, 1
      %p44 = por %p42, %p43
      %p46 = scmp.ne.s32.totalorder %s29, %s45
      %p47 = scmp.eq.s32.totalorder %s21, 0
      %p48 = por %p46, %p47
      %s50 = sadd.s32 %s49, 1
      %p53 = scmp.eq.s32.totalorder %s15, 1
      %p54 = scmp.ne.s32.totalorder %s49, %s51
      %p55 = scmp.eq.s32.totalorder %s15, 0
      %p56 = por %p54, %p55
      %p57 = scmp.ne.s32.totalorder %s49, %s51
      %p58 = scmp.eq.s32.totalorder %s20, 1
      %p59 = por %p57, %p58
      %p60 = scmp.ne.s32.totalorder %s51, %s52
      %p61 = scmp.eq.s32.totalorder %s20, 0
      %p62 = por %p60, %p61
      %p63 = scmp.ne.s32.totalorder %s51, %s52
      %p64 = scmp.eq.s32.totalorder %s21, 1
      %p65 = por %p63, %p64
      %p67 = scmp.ne.s32.totalorder %s52, %s66
      %p68 = scmp.eq.s32.totalorder %s21, 0
      %p69 = por %p67, %p68
      %s71 = sadd.s32 %s70, 1
      %p74 = scmp.eq.s32.totalorder %s15, 1
      %p75 = scmp.ne.s32.totalorder %s70, %s72
      %p76 = scmp.eq.s32.totalorder %s15, 0
      %p77 = por %p75, %p76
      %p78 = scmp.ne.s32.totalorder %s70, %s72
      %p79 = scmp.eq.s32.totalorder %s20, 1
      %p80 = por %p78, %p79
      %p81 = scmp.ne.s32.totalorder %s72, %s73
      %p82 = scmp.eq.s32.totalorder %s20, 0
      %p83 = por %p81, %p82
      %p84 = scmp.ne.s32.totalorder %s72, %s73
      %p85 = scmp.eq.s32.totalorder %s21, 1
      %p86 = por %p84, %p85
      %p88 = scmp.ne.s32.totalorder %s73, %s87
      %p89 = scmp.eq.s32.totalorder %s21, 0
      %p90 = por %p88, %p89
      %s92 = sadd.s32 %s91, 1
      %p95 = scmp.eq.s32.totalorder %s15, 1
      %p96 = scmp.ne.s32.totalorder %s91, %s93
      %p97 = scmp.eq.s32.totalorder %s15, 0
      %p98 = por %p96, %p97
      %p99 = scmp.ne.s32.totalorder %s91, %s93
      %p100 = scmp.eq.s32.totalorder %s20, 1
      %p101 = por %p99, %p100
      %p102 = scmp.ne.s32.totalorder %s93, %s94
      %p103 = scmp.eq.s32.totalorder %s20, 0
      %p104 = por %p102, %p103
      %p105 = scmp.ne.s32.totalorder %s93, %s94
      %p106 = scmp.eq.s32.totalorder %s21, 1
      %p107 = por %p105, %p106
      %p109 = scmp.ne.s32.totalorder %s94, %s108
      %p110 = scmp.eq.s32.totalorder %s21, 0
      %p111 = por %p109, %p110
      %s113 = sadd.s32 %s112, 1
      %p116 = scmp.eq.s32.totalorder %s15, 1
      %p117 = scmp.ne.s32.totalorder %s112, %s114
      %p118 = scmp.eq.s32.totalorder %s15, 0
      %p119 = por %p117, %p118
      %p120 = scmp.ne.s32.totalorder %s112, %s114
      %p121 = scmp.eq.s32.totalorder %s20, 1
      %p122 = por %p120, %p121
      %p123 = scmp.ne.s32.totalorder %s114, %s115
      %p124 = scmp.eq.s32.totalorder %s20, 0
      %p125 = por %p123, %p124
      %p126 = scmp.ne.s32.totalorder %s114, %s115
      %p127 = scmp.eq.s32.totalorder %s21, 1
      %p128 = por %p126, %p127
      %p130 = scmp.ne.s32.totalorder %s115, %s129
      %p131 = scmp.eq.s32.totalorder %s21, 0
      %p132 = por %p130, %p131
      %s134 = sadd.s32 %s133, 1
      %p137 = scmp.eq.s32.totalorder %s15, 1
      %p138 = scmp.ne.s32.totalorder %s133, %s135
      %p139 = scmp.eq.s32.totalorder %s15, 0
      %p140 = por %p138, %p139
      %p141 = scmp.ne.s32.totalorder %s133, %s135
      %p142 = scmp.eq.s32.totalorder %s20, 1
      %p143 = por %p141, %p142
      %p144 = scmp.ne.s32.totalorder %s135, %s136
      %p145 = scmp.eq.s32.totalorder %s20, 0
      %p146 = por %p144, %p145
      %p147 = scmp.ne.s32.totalorder %s135, %s136
      %p148 = scmp.eq.s32.totalorder %s21, 1
      %p149 = por %p147, %p148
      %p151 = scmp.ne.s32.totalorder %s136, %s150
      %p152 = scmp.eq.s32.totalorder %s21, 0
      %p153 = por %p151, %p152
      %s154 = ssub.s32 %s15, %s22
      %p155 = scmp.eq.s32.totalorder %s154, 0
      %s157 = sadd.s32 %s156, 1
      %s158 = scalar_select %p155, %s156, %s157
      %p161 = pneg %p155
      %p162 = scmp.eq.s32.totalorder %s15, 1
      %p163 = por %p161, %p162
      %p164 = scmp.ne.s32.totalorder %s156, %s159
      %p165 = scmp.eq.s32.totalorder %s15, 0
      %p166 = por %p164, %p165
      %p167 = scmp.ne.s32.totalorder %s156, %s159
      %p168 = scmp.eq.s32.totalorder %s20, 1
      %p169 = por %p167, %p168
      %p170 = scmp.ne.s32.totalorder %s159, %s160
      %p171 = scmp.eq.s32.totalorder %s20, 0
      %p172 = por %p170, %p171
      %p173 = scmp.ne.s32.totalorder %s159, %s160
      %p174 = scmp.eq.s32.totalorder %s21, 1
      %p175 = por %p173, %p174
      %p177 = scmp.ne.s32.totalorder %s160, %s176
      %p178 = scmp.eq.s32.totalorder %s21, 0
      %p179 = por %p177, %p178
      %p180 = scmp.le.s32.totalorder 1, %s15
      %p181 = scmp.lt.s32.totalorder %s15, 3
      %p182 = pnand %p180, %p181
      %p183 = pneg %p182
      // Predicated region
      $region9: #{scratch_cnn_forward.1} parent=5 // pred_check
        _
      $region10: #{scratch_cnn_forward.1} parent=5 // pred_check_branch
        %185 = sbr.rel (%p182) target = $region12
      $region11: #{scratch_cnn_forward.1} parent=5 // pred_region
        %s186 = ssub.s32 %s15, 1
        // Predicated region
        $region13: #{scratch_cnn_forward.1} parent=11 // pred_check
          %p187 = pneg %p62
        $region14: #{scratch_cnn_forward.1} parent=11 // pred_check_branch
          %189 = sbr.rel (%p187) target = $region16
        $region15: #{scratch_cnn_forward.1} parent=11 // pred_region
          _
        $region16: #{scratch_cnn_forward.1} parent=11 // pred_fallthru
          _
        // Predicated region
        $region17: #{scratch_cnn_forward.1} parent=11 // pred_check
          %p190 = pneg %p83
        $region18: #{scratch_cnn_forward.1} parent=11 // pred_check_branch
          %192 = sbr.rel (%p190) target = $region20
        $region19: #{scratch_cnn_forward.1} parent=11 // pred_region
          _
        $region20: #{scratch_cnn_forward.1} parent=11 // pred_fallthru
          _
        // Predicated region
        $region21: #{scratch_cnn_forward.1} parent=11 // pred_check
          %p193 = pneg %p104
        $region22: #{scratch_cnn_forward.1} parent=11 // pred_check_branch
          %195 = sbr.rel (%p193) target = $region24
        $region23: #{scratch_cnn_forward.1} parent=11 // pred_region
          _
        $region24: #{scratch_cnn_forward.1} parent=11 // pred_fallthru
          _
        // Predicated region
        $region25: #{scratch_cnn_forward.1} parent=11 // pred_check
          %p196 = pneg %p125
        $region26: #{scratch_cnn_forward.1} parent=11 // pred_check_branch
          %198 = sbr.rel (%p196) target = $region28
        $region27: #{scratch_cnn_forward.1} parent=11 // pred_region
          _
        $region28: #{scratch_cnn_forward.1} parent=11 // pred_fallthru
          _
        // Predicated region
        $region29: #{scratch_cnn_forward.1} parent=11 // pred_check
          %p199 = pneg %p146
        $region30: #{scratch_cnn_forward.1} parent=11 // pred_check_branch
          %201 = sbr.rel (%p199) target = $region32
        $region31: #{scratch_cnn_forward.1} parent=11 // pred_region
          _
        $region32: #{scratch_cnn_forward.1} parent=11 // pred_fallthru
          _
      $region12: #{scratch_cnn_forward.1} parent=5 // pred_fallthru
        _
      %p202 = scmp.lt.s32.totalorder %s15, 2
      // Predicated region
      $region33: #{scratch_cnn_forward.1} parent=5 // pred_check
        %p203 = pneg %p202
      $region34: #{scratch_cnn_forward.1} parent=5 // pred_check_branch
        %205 = sbr.rel (%p203) target = $region36
      $region35: #{scratch_cnn_forward.1} parent=5 // pred_region
        // Predicated region
        $region37: #{scratch_cnn_forward.1} parent=35 // pred_check
          %p206 = pneg %p35
        $region38: #{scratch_cnn_forward.1} parent=35 // pred_check_branch
          %208 = sbr.rel (%p206) target = $region40
        $region39: #{scratch_cnn_forward.1} parent=35 // pred_region
          %p209 = scmp.lt.s32.totalorder %s15, 1
          %s210 = scalar_select %p209, %s15, 1
          %s211 = smul.addr %s210, 8
          %s212 = smul.addr %s211, 8
          %s213 = scalar_lea.vmem %s0, %s212
        $region40: #{scratch_cnn_forward.1} parent=35 // pred_fallthru
          _
      $region36: #{scratch_cnn_forward.1} parent=5 // pred_fallthru
        _
      %p214 = scmp.le.s32.totalorder 1, %s15
      %p215 = scmp.lt.s32.totalorder %s15, 3
      %p216 = pnand %p214, %p215
      %p217 = pneg %p216
      // Predicated region
      $region41: #{scratch_cnn_forward.1} parent=5 // pred_check
        _
      $region42: #{scratch_cnn_forward.1} parent=5 // pred_check_branch
        %219 = sbr.rel (%p216) target = $region44
      $region43: #{scratch_cnn_forward.1} parent=5 // pred_region
        %s220 = ssub.s32 %s15, 1
        %p221 = scmp.lt.s32.totalorder %s20, 1
        %s222 = scalar_select %p221, %s20, 1
        %s223 = smul.addr %s222, 8
        %s224 = smul.addr %s223, 8
        %s225 = scalar_lea.vmem %s0, %s224
        %p226 = pneg %p41
        %p227 = pneg %p38
        %p228 = pneg %p62
        %p229 = pneg %p59
        %p230 = pneg %p83
        %p231 = pneg %p80
        %p232 = pneg %p104
        %p233 = pneg %p101
        %p234 = pneg %p125
        %p235 = pneg %p122
        %p236 = pneg %p146
        %p237 = pneg %p143
        %p238 = pneg %p172
        %p239 = pneg %p169
        %s240 = sand.u32 %s159, 1
        %s241 = scalar_lea.sflag [#allocation4], %s240
        %s242 = sand.u32 %s159, 1
        %s243 = scalar_lea.vmem [#allocation3], %s242
        %p244 = scmp.lt.s32.totalorder %s20, 1
        %s245 = scalar_select %p244, %s20, 1
        %s246 = smul.addr %s245, 8
        %s247 = smul.addr %s246, 8
        %s248 = scalar_lea.vmem %s0, %s247
        %v249 = vld [vmem:[%s248] sm:$0xff]
        %v250 = vld [vmem:[%s248 + $0x8] sm:$0xff]
        %v251 = vld [vmem:[%s248 + $0x10] sm:$0xff]
        %v252 = vld [vmem:[%s248 + $0x18] sm:$0xff]
        %v253 = vld [vmem:[%s248 + $0x20] sm:$0xff]
        %v254 = vld [vmem:[%s248 + $0x28] sm:$0xff]
        %v255 = vld [vmem:[%s248 + $0x30] sm:$0xff]
        %v256 = vld [vmem:[%s248 + $0x38] sm:$0xff]
        %v257 = vld [vmem:[%s1] sm:$0xff]
        %v258 = vld [vmem:[%s1 + $0x8] sm:$0x1]
        %v259 = vld [vmem:[%s2] sm:$0x1]
        %v261 = vlaneseq
        %v262 = vshrl.u32 %v261, 7
        %v263 = vsub.s32 0, %v262
        %v264 = vrot.slane %v259, %v263
        %vm266 = vcmask 72704
        %v268 = vsel %vm266, %v249, 0
        %v271 = vsel %vm266, %v250, 0
        %v274 = vsel %vm266, %v251, 0
        %v277 = vsel %vm266, %v252, 0
        %v280 = vsel %vm266, %v253, 0
        %v283 = vsel %vm266, %v254, 0
        %v286 = vsel %vm266, %v255, 0
        %v289 = vsel %vm266, %v256, 0
        %vm291 = vcmask 1040384
        %v293 = vsel %vm291, %v258, 0
        %295 = vmatprep.subr.mxu0 0.0
        %296 = vmatpush1.msra.mxu0 %v257
        %297 = vmatprep.subr.mxu0 0.0
        %298 = vmatpush1.msra.mxu0 %v293
        %299 = vmatprep.subr.mxu0 0.0
        %300 = vmatpush1.msra.mxu0 0.0
        %301 = vmatprep.subr.mxu0 0.0
        %302 = vmatpush1.msra.mxu0 0.0
        %303 = vmatprep.subr.mxu0 0.0
        %304 = vmatpush1.msra.mxu0 0.0
        %305 = vmatprep.subr.mxu0 0.0
        %306 = vmatpush1.msra.mxu0 0.0
        %307 = vmatprep.subr.mxu0 0.0
        %308 = vmatpush1.msra.mxu0 0.0
        %309 = vmatprep.subr.mxu0 0.0
        %310 = vmatpush1.msra.mxu0 0.0
        %311 = vmatprep.subr.mxu0 0.0
        %312 = vmatpush1.msra.mxu0 0.0
        %313 = vmatprep.subr.mxu0 0.0
        %314 = vmatpush1.msra.mxu0 0.0
        %315 = vmatprep.subr.mxu0 0.0
        %316 = vmatpush1.msra.mxu0 0.0
        %317 = vmatprep.subr.mxu0 0.0
        %318 = vmatpush1.msra.mxu0 0.0
        %319 = vmatprep.subr.mxu0 0.0
        %320 = vmatpush1.msra.mxu0 0.0
        %321 = vmatprep.subr.mxu0 0.0
        %322 = vmatpush1.msra.mxu0 0.0
        %323 = vmatprep.subr.mxu0 0.0
        %324 = vmatpush1.msra.mxu0 0.0
        %325 = vmatprep.subr.mxu0 0.0
        %326 = vmatpush1.msra.mxu0 0.0
        %327 = vmatprep.subr.mxu0 0.0
        %328 = vmatpush1.msra.mxu0 0.0
        %329 = vmatprep.subr.mxu0 0.0
        %330 = vmatpush1.msra.mxu0 0.0
        %331 = vmatprep.subr.mxu0 0.0
        %332 = vmatpush1.msra.mxu0 0.0
        %333 = vmatprep.subr.mxu0 0.0
        %334 = vmatpush1.msra.mxu0 0.0
        %335 = vmatprep.subr.mxu0 0.0
        %336 = vmatpush1.msra.mxu0 0.0
        %337 = vmatprep.subr.mxu0 0.0
        %338 = vmatpush1.msra.mxu0 0.0
        %339 = vmatprep.subr.mxu0 0.0
        %340 = vmatpush1.msra.mxu0 0.0
        %341 = vmatprep.subr.mxu0 0.0
        %342 = vmatpush1.msra.mxu0 0.0
        %343 = vmatprep.subr.mxu0 0.0
        %344 = vmatpush1.msra.mxu0 0.0
        %345 = vmatprep.subr.mxu0 0.0
        %346 = vmatpush1.msra.mxu0 0.0
        %347 = vmatprep.subr.mxu0 0.0
        %348 = vmatpush1.msra.mxu0 0.0
        %349 = vmatprep.subr.mxu0 0.0
        %350 = vmatpush1.msra.mxu0 0.0
        %351 = vmatprep.subr.mxu0 0.0
        %352 = vmatpush1.msra.mxu0 0.0
        %353 = vmatprep.subr.mxu0 0.0
        %354 = vmatpush1.msra.mxu0 0.0
        %355 = vmatprep.subr.mxu0 0.0
        %356 = vmatpush1.msra.mxu0 0.0
        %357 = vmatprep.subr.mxu0 0.0
        %358 = vmatpush1.msra.mxu0 0.0
        %359 = vmatprep.mubr.f32.mxu0 0.0
        %360 = vmatmul.mubr.f32.gmra.mrb[0].mxu0 %v268
        %v361 = vpop.f32.mrb[0].mxu0
        %v362 = vadd.f32 %v264, %v361
        %v363 = vpop.f32.mrb[0].mxu0
        %364 = vmatprep.mubr.f32.mxu0 0.0
        %365 = vmatmul.mubr.f32.gmra.mrb[0].mxu0 %v271
        %v366 = vpop.f32.mrb[0].mxu0
        %v367 = vadd.f32 %v264, %v366
        %v368 = vpop.f32.mrb[0].mxu0
        %369 = vmatprep.mubr.f32.mxu0 0.0
        %370 = vmatmul.mubr.f32.gmra.mrb[0].mxu0 %v274
        %v371 = vpop.f32.mrb[0].mxu0
        %v372 = vadd.f32 %v264, %v371
        %v373 = vpop.f32.mrb[0].mxu0
        %374 = vmatprep.mubr.f32.mxu0 0.0
        %375 = vmatmul.mubr.f32.gmra.mrb[0].mxu0 %v277
        %v376 = vpop.f32.mrb[0].mxu0
        %v377 = vadd.f32 %v264, %v376
        %v378 = vpop.f32.mrb[0].mxu0
        %379 = vmatprep.mubr.f32.mxu0 0.0
        %380 = vmatmul.mubr.f32.gmra.mrb[0].mxu0 %v280
        %v381 = vpop.f32.mrb[0].mxu0
        %v382 = vadd.f32 %v264, %v381
        %v383 = vpop.f32.mrb[0].mxu0
        %384 = vmatprep.mubr.f32.mxu0 0.0
        %385 = vmatmul.mubr.f32.gmra.mrb[0].mxu0 %v283
        %v386 = vpop.f32.mrb[0].mxu0
        %v387 = vadd.f32 %v264, %v386
        %v388 = vpop.f32.mrb[0].mxu0
        %389 = vmatprep.mubr.f32.mxu0 0.0
        %390 = vmatmul.mubr.f32.gmra.mrb[0].mxu0 %v286
        %v391 = vpop.f32.mrb[0].mxu0
        %v392 = vadd.f32 %v264, %v391
        %v393 = vpop.f32.mrb[0].mxu0
        %394 = vmatprep.mubr.f32.mxu0 0.0
        %395 = vmatmul.mubr.f32.gmra.mrb[0].mxu0 %v289
        %v396 = vpop.f32.mrb[0].mxu0
        %v397 = vadd.f32 %v264, %v396
        %v398 = vpop.f32.mrb[0].mxu0
        %399 = vdwg.mxu0
        %v400 = vmax.f32 %v362, 0.0
        %v401 = vmax.f32 %v367, 0.0
        %v402 = vmax.f32 %v372, 0.0
        %v403 = vmax.f32 %v377, 0.0
        %v404 = vmax.f32 %v382, 0.0
        %v405 = vmax.f32 %v387, 0.0
        %v406 = vmax.f32 %v392, 0.0
        %v407 = vmax.f32 %v397, 0.0
        %vm408 = vcmask 261120
        %409 = vst.msk [vmem:[#allocation2] sm:$0xff] %vm408, 0.0
        %vm410 = vcmask 254976
        %411 = vst.msk [vmem:[#allocation2 + $0x8] sm:$0x3] %vm410, 0.0
        %412 = vst.msk [vmem:[#allocation2 + $0x10] sm:$0xff] %vm408, 0.0
        %413 = vst.msk [vmem:[#allocation2 + $0x18] sm:$0x3] %vm410, 0.0
        %414 = vst.msk [vmem:[#allocation2 + $0x20] sm:$0xff] %vm408, 0.0
        %415 = vst.msk [vmem:[#allocation2 + $0x28] sm:$0x3] %vm410, 0.0
        %416 = vst.msk [vmem:[#allocation2 + $0x30] sm:$0xff] %vm408, 0.0
        %417 = vst.msk [vmem:[#allocation2 + $0x38] sm:$0x3] %vm410, 0.0
        %418 = vst.msk [vmem:[#allocation2 + $0x40] sm:$0xff] %vm408, 0.0
        %419 = vst.msk [vmem:[#allocation2 + $0x48] sm:$0x3] %vm410, 0.0
        %420 = vst.msk [vmem:[#allocation2 + $0x50] sm:$0xff] %vm408, 0.0
        %421 = vst.msk [vmem:[#allocation2 + $0x58] sm:$0x3] %vm410, 0.0
        %422 = vst.msk [vmem:[#allocation2 + $0x60] sm:$0xff] %vm408, 0.0
        %423 = vst.msk [vmem:[#allocation2 + $0x68] sm:$0x3] %vm410, 0.0
        %424 = vst.msk [vmem:[#allocation2 + $0x70] sm:$0xff] %vm408, 0.0
        %425 = vst.msk [vmem:[#allocation2 + $0x78] sm:$0x3] %vm410, 0.0
        %426 = vst.msk [vmem:[#allocation2 + $0x80] sm:$0xff] %vm408, 0.0
        %427 = vst.msk [vmem:[#allocation2 + $0x88] sm:$0x3] %vm410, 0.0
        %428 = vst.msk [vmem:[#allocation2 + $0x90] sm:$0xff] %vm408, 0.0
        %429 = vst.msk [vmem:[#allocation2 + $0x98] sm:$0x3] %vm410, 0.0
        %s430 = scalar_lea.vmem [#allocation2], 16
        %431 = vst.msk [vmem:[%s430 + $0x1] sm:$0xff] %vm408, %v400
        %432 = vst.msk [vmem:[%s430 + $0x11] sm:$0xff] %vm408, %v401
        %433 = vst.msk [vmem:[%s430 + $0x21] sm:$0xff] %vm408, %v402
        %434 = vst.msk [vmem:[%s430 + $0x31] sm:$0xff] %vm408, %v403
        %435 = vst.msk [vmem:[%s430 + $0x41] sm:$0xff] %vm408, %v404
        %436 = vst.msk [vmem:[%s430 + $0x51] sm:$0xff] %vm408, %v405
        %437 = vst.msk [vmem:[%s430 + $0x61] sm:$0xff] %vm408, %v406
        %438 = vst.msk [vmem:[%s430 + $0x71] sm:$0xff] %vm408, %v407
        %v439 = vld [vmem:[#allocation2] sm:$0xff]
        %v440 = vld [vmem:[#allocation2 + $0x10] sm:$0xff]
        %v441 = vld [vmem:[#allocation2 + $0x20] sm:$0xff]
        %v442 = vld [vmem:[#allocation2 + $0x30] sm:$0xff]
        %v443 = vld [vmem:[#allocation2 + $0x40] sm:$0xff]
        %v444 = vld [vmem:[#allocation2 + $0x50] sm:$0xff]
        %v445 = vld [vmem:[#allocation2 + $0x60] sm:$0xff]
        %v446 = vld [vmem:[#allocation2 + $0x70] sm:$0xff]
        %v447 = vld [vmem:[%s3] sm:$0xff]
        %v448 = vld [vmem:[%s3 + $0x8] sm:$0xff]
        %v449 = vld [vmem:[%s3 + $0x10] sm:$0xff]
        %v450 = vld [vmem:[%s3 + $0x18] sm:$0xff]
        %v451 = vld [vmem:[#allocation2 + $0x1] sm:$0xff]
        %v452 = vld [vmem:[#allocation2 + $0x11] sm:$0xff]
        %v453 = vld [vmem:[#allocation2 + $0x21] sm:$0xff]
        %v454 = vld [vmem:[#allocation2 + $0x31] sm:$0xff]
        %v455 = vld [vmem:[#allocation2 + $0x41] sm:$0xff]
        %v456 = vld [vmem:[#allocation2 + $0x51] sm:$0xff]
        %v457 = vld [vmem:[#allocation2 + $0x61] sm:$0xff]
        %v458 = vld [vmem:[#allocation2 + $0x71] sm:$0xff]
        %s459 = scalar_lea.vmem %s3, 32
        %v460 = vld [vmem:[%s459] sm:$0xff]
        %v461 = vld [vmem:[%s459 + $0x8] sm:$0xff]
        %v462 = vld [vmem:[%s459 + $0x10] sm:$0xff]
        %v463 = vld [vmem:[%s459 + $0x18] sm:$0xff]
        %v465 = vsel %vm408, %v451, 0
        %v468 = vsel %vm408, %v452, 0
        %v471 = vsel %vm408, %v453, 0
        %v474 = vsel %vm408, %v454, 0
        %v477 = vsel %vm408, %v455, 0
        %v480 = vsel %vm408, %v456, 0
        %v483 = vsel %vm408, %v457, 0
        %v486 = vsel %vm408, %v458, 0
        %488 = vmatprep.subr.mxu0 0.0
        %489 = vmatpush1.msra.mxu0 %v460
        %490 = vmatprep.subr.mxu0 0.0
        %491 = vmatpush1.msra.mxu0 %v461
        %492 = vmatprep.subr.mxu0 0.0
        %493 = vmatpush1.msra.mxu0 %v462
        %494 = vmatprep.subr.mxu0 0.0
        %495 = vmatpush1.msra.mxu0 %v463
        %496 = vmatprep.subr.mxu0 0.0
        %497 = vmatpush1.msra.mxu0 0.0
        %498 = vmatprep.subr.mxu0 0.0
        %499 = vmatpush1.msra.mxu0 0.0
        %500 = vmatprep.subr.mxu0 0.0
        %501 = vmatpush1.msra.mxu0 0.0
        %502 = vmatprep.subr.mxu0 0.0
        %503 = vmatpush1.msra.mxu0 0.0
        %504 = vmatprep.subr.mxu0 0.0
        %505 = vmatpush1.msra.mxu0 0.0
        %506 = vmatprep.subr.mxu0 0.0
        %507 = vmatpush1.msra.mxu0 0.0
        %508 = vmatprep.subr.mxu0 0.0
        %509 = vmatpush1.msra.mxu0 0.0
        %510 = vmatprep.subr.mxu0 0.0
        %511 = vmatpush1.msra.mxu0 0.0
        %512 = vmatprep.subr.mxu0 0.0
        %513 = vmatpush1.msra.mxu0 0.0
        %514 = vmatprep.subr.mxu0 0.0
        %515 = vmatpush1.msra.mxu0 0.0
        %516 = vmatprep.subr.mxu0 0.0
        %517 = vmatpush1.msra.mxu0 0.0
        %518 = vmatprep.subr.mxu0 0.0
        %519 = vmatpush1.msra.mxu0 0.0
        %520 = vmatprep.subr.mxu0 0.0
        %521 = vmatpush1.msra.mxu0 0.0
        %522 = vmatprep.subr.mxu0 0.0
        %523 = vmatpush1.msra.mxu0 0.0
        %524 = vmatprep.subr.mxu0 0.0
        %525 = vmatpush1.msra.mxu0 0.0
        %526 = vmatprep.subr.mxu0 0.0
        %527 = vmatpush1.msra.mxu0 0.0
        %528 = vmatprep.subr.mxu0 0.0
        %529 = vmatpush1.msra.mxu0 0.0
        %530 = vmatprep.subr.mxu0 0.0
        %531 = vmatpush1.msra.mxu0 0.0
        %532 = vmatprep.subr.mxu0 0.0
        %533 = vmatpush1.msra.mxu0 0.0
        %534 = vmatprep.subr.mxu0 0.0
        %535 = vmatpush1.msra.mxu0 0.0
        %536 = vmatprep.subr.mxu0 0.0
        %537 = vmatpush1.msra.mxu0 0.0
        %538 = vmatprep.subr.mxu0 0.0
        %539 = vmatpush1.msra.mxu0 0.0
        %540 = vmatprep.subr.mxu0 0.0
        %541 = vmatpush1.msra.mxu0 0.0
        %542 = vmatprep.subr.mxu0 0.0
        %543 = vmatpush1.msra.mxu0 0.0
        %544 = vmatprep.subr.mxu0 0.0
        %545 = vmatpush1.msra.mxu0 0.0
        %546 = vmatprep.subr.mxu0 0.0
        %547 = vmatpush1.msra.mxu0 0.0
        %548 = vmatprep.subr.mxu0 0.0
        %549 = vmatpush1.msra.mxu0 0.0
        %550 = vmatprep.subr.mxu0 0.0
        %551 = vmatpush1.msra.mxu0 0.0
        %552 = vmatprep.mubr.f32.mxu0 0.0
        %553 = vmatmul.mubr.f32.gmra.mrb[0].mxu0 %v465
        %v554 = vpop.f32.mrb[0].mxu0
        %v555 = vadd.f32 0.0, %v554
        %v556 = vpop.f32.mrb[0].mxu0
        %557 = vmatprep.mubr.f32.mxu0 0.0
        %558 = vmatmul.mubr.f32.gmra.mrb[0].mxu0 %v468
        %v559 = vpop.f32.mrb[0].mxu0
        %v560 = vadd.f32 0.0, %v559
        %v561 = vpop.f32.mrb[0].mxu0
        %562 = vmatprep.mubr.f32.mxu0 0.0
        %563 = vmatmul.mubr.f32.gmra.mrb[0].mxu0 %v471
        %v564 = vpop.f32.mrb[0].mxu0
        %v565 = vadd.f32 0.0, %v564
        %v566 = vpop.f32.mrb[0].mxu0
        %567 = vmatprep.mubr.f32.mxu0 0.0
        %568 = vmatmul.mubr.f32.gmra.mrb[0].mxu0 %v474
        %v569 = vpop.f32.mrb[0].mxu0
        %v570 = vadd.f32 0.0, %v569
        %v571 = vpop.f32.mrb[0].mxu0
        %572 = vmatprep.mubr.f32.mxu0 0.0
        %573 = vmatmul.mubr.f32.gmra.mrb[0].mxu0 %v477
        %v574 = vpop.f32.mrb[0].mxu0
        %v575 = vadd.f32 0.0, %v574
        %v576 = vpop.f32.mrb[0].mxu0
        %577 = vmatprep.mubr.f32.mxu0 0.0
        %578 = vmatmul.mubr.f32.gmra.mrb[0].mxu0 %v480
        %v579 = vpop.f32.mrb[0].mxu0
        %v580 = vadd.f32 0.0, %v579
        %v581 = vpop.f32.mrb[0].mxu0
        %582 = vmatprep.mubr.f32.mxu0 0.0
        %583 = vmatmul.mubr.f32.gmra.mrb[0].mxu0 %v483
        %v584 = vpop.f32.mrb[0].mxu0
        %v585 = vadd.f32 0.0, %v584
        %v586 = vpop.f32.mrb[0].mxu0
        %587 = vmatprep.mubr.f32.mxu0 0.0
        %588 = vmatmul.mubr.f32.gmra.mrb[0].mxu0 %v486
        %v589 = vpop.f32.mrb[0].mxu0
        %v590 = vadd.f32 0.0, %v589
        %v591 = vpop.f32.mrb[0].mxu0
        %592 = vdwg.mxu0
        %v594 = vsel %vm408, %v439, 0
        %v597 = vsel %vm408, %v440, 0
        %v600 = vsel %vm408, %v441, 0
        %v603 = vsel %vm408, %v442, 0
        %v606 = vsel %vm408, %v443, 0
        %v609 = vsel %vm408, %v444, 0
        %v612 = vsel %vm408, %v445, 0
        %v615 = vsel %vm408, %v446, 0
        %617 = vmatprep.subr.mxu0 0.0
        %618 = vmatpush1.msra.mxu0 %v447
        %619 = vmatprep.subr.mxu0 0.0
        %620 = vmatpush1.msra.mxu0 %v448
        %621 = vmatprep.subr.mxu0 0.0
        %622 = vmatpush1.msra.mxu0 %v449
        %623 = vmatprep.subr.mxu0 0.0
        %624 = vmatpush1.msra.mxu0 %v450
        %625 = vmatprep.subr.mxu0 0.0
        %626 = vmatpush1.msra.mxu0 0.0
        %627 = vmatprep.subr.mxu0 0.0
        %628 = vmatpush1.msra.mxu0 0.0
        %629 = vmatprep.subr.mxu0 0.0
        %630 = vmatpush1.msra.mxu0 0.0
        %631 = vmatprep.subr.mxu0 0.0
        %632 = vmatpush1.msra.mxu0 0.0
        %633 = vmatprep.subr.mxu0 0.0
        %634 = vmatpush1.msra.mxu0 0.0
        %635 = vmatprep.subr.mxu0 0.0
        %636 = vmatpush1.msra.mxu0 0.0
        %637 = vmatprep.subr.mxu0 0.0
        %638 = vmatpush1.msra.mxu0 0.0
        %639 = vmatprep.subr.mxu0 0.0
        %640 = vmatpush1.msra.mxu0 0.0
        %641 = vmatprep.subr.mxu0 0.0
        %642 = vmatpush1.msra.mxu0 0.0
        %643 = vmatprep.subr.mxu0 0.0
        %644 = vmatpush1.msra.mxu0 0.0
        %645 = vmatprep.subr.mxu0 0.0
        %646 = vmatpush1.msra.mxu0 0.0
        %647 = vmatprep.subr.mxu0 0.0
        %648 = vmatpush1.msra.mxu0 0.0
        %649 = vmatprep.subr.mxu0 0.0
        %650 = vmatpush1.msra.mxu0 0.0
        %651 = vmatprep.subr.mxu0 0.0
        %652 = vmatpush1.msra.mxu0 0.0
        %653 = vmatprep.subr.mxu0 0.0
        %654 = vmatpush1.msra.mxu0 0.0
        %655 = vmatprep.subr.mxu0 0.0
        %656 = vmatpush1.msra.mxu0 0.0
        %657 = vmatprep.subr.mxu0 0.0
        %658 = vmatpush1.msra.mxu0 0.0
        %659 = vmatprep.subr.mxu0 0.0
        %660 = vmatpush1.msra.mxu0 0.0
        %661 = vmatprep.subr.mxu0 0.0
        %662 = vmatpush1.msra.mxu0 0.0
        %663 = vmatprep.subr.mxu0 0.0
        %664 = vmatpush1.msra.mxu0 0.0
        %665 = vmatprep.subr.mxu0 0.0
        %666 = vmatpush1.msra.mxu0 0.0
        %667 = vmatprep.subr.mxu0 0.0
        %668 = vmatpush1.msra.mxu0 0.0
        %669 = vmatprep.subr.mxu0 0.0
        %670 = vmatpush1.msra.mxu0 0.0
        %671 = vmatprep.subr.mxu0 0.0
        %672 = vmatpush1.msra.mxu0 0.0
        %673 = vmatprep.subr.mxu0 0.0
        %674 = vmatpush1.msra.mxu0 0.0
        %675 = vmatprep.subr.mxu0 0.0
        %676 = vmatpush1.msra.mxu0 0.0
        %677 = vmatprep.subr.mxu0 0.0
        %678 = vmatpush1.msra.mxu0 0.0
        %679 = vmatprep.subr.mxu0 0.0
        %680 = vmatpush1.msra.mxu0 0.0
        %681 = vmatprep.mubr.f32.mxu0 0.0
        %682 = vmatmul.mubr.f32.gmra.mrb[0].mxu0 %v594
        %v683 = vpop.f32.mrb[0].mxu0
        %v684 = vadd.f32 %v555, %v683
        %v685 = vpop.f32.mrb[0].mxu0
        %686 = vmatprep.mubr.f32.mxu0 0.0
        %687 = vmatmul.mubr.f32.gmra.mrb[0].mxu0 %v597
        %v688 = vpop.f32.mrb[0].mxu0
        %v689 = vadd.f32 %v560, %v688
        %v690 = vpop.f32.mrb[0].mxu0
        %691 = vmatprep.mubr.f32.mxu0 0.0
        %692 = vmatmul.mubr.f32.gmra.mrb[0].mxu0 %v600
        %v693 = vpop.f32.mrb[0].mxu0
        %v694 = vadd.f32 %v565, %v693
        %v695 = vpop.f32.mrb[0].mxu0
        %696 = vmatprep.mubr.f32.mxu0 0.0
        %697 = vmatmul.mubr.f32.gmra.mrb[0].mxu0 %v603
        %v698 = vpop.f32.mrb[0].mxu0
        %v699 = vadd.f32 %v570, %v698
        %v700 = vpop.f32.mrb[0].mxu0
        %701 = vmatprep.mubr.f32.mxu0 0.0
        %702 = vmatmul.mubr.f32.gmra.mrb[0].mxu0 %v606
        %v703 = vpop.f32.mrb[0].mxu0
        %v704 = vadd.f32 %v575, %v703
        %v705 = vpop.f32.mrb[0].mxu0
        %706 = vmatprep.mubr.f32.mxu0 0.0
        %707 = vmatmul.mubr.f32.gmra.mrb[0].mxu0 %v609
        %v708 = vpop.f32.mrb[0].mxu0
        %v709 = vadd.f32 %v580, %v708
        %v710 = vpop.f32.mrb[0].mxu0
        %711 = vmatprep.mubr.f32.mxu0 0.0
        %712 = vmatmul.mubr.f32.gmra.mrb[0].mxu0 %v612
        %v713 = vpop.f32.mrb[0].mxu0
        %v714 = vadd.f32 %v585, %v713
        %v715 = vpop.f32.mrb[0].mxu0
        %716 = vmatprep.mubr.f32.mxu0 0.0
        %717 = vmatmul.mubr.f32.gmra.mrb[0].mxu0 %v615
        %v718 = vpop.f32.mrb[0].mxu0
        %v719 = vadd.f32 %v590, %v718
        %v720 = vpop.f32.mrb[0].mxu0
        %721 = vdwg.mxu0
        %v722 = vld [vmem:[#allocation2 + $0x2] sm:$0xff]
        %v723 = vld [vmem:[#allocation2 + $0x12] sm:$0xff]
        %v724 = vld [vmem:[#allocation2 + $0x22] sm:$0xff]
        %v725 = vld [vmem:[#allocation2 + $0x32] sm:$0xff]
        %v726 = vld [vmem:[#allocation2 + $0x42] sm:$0xff]
        %v727 = vld [vmem:[#allocation2 + $0x52] sm:$0xff]
        %v728 = vld [vmem:[#allocation2 + $0x62] sm:$0xff]
        %v729 = vld [vmem:[#allocation2 + $0x72] sm:$0xff]
        %s730 = scalar_lea.vmem %s3, 64
        %v731 = vld [vmem:[%s730] sm:$0xff]
        %v732 = vld [vmem:[%s730 + $0x8] sm:$0xff]
        %v733 = vld [vmem:[%s730 + $0x10] sm:$0xff]
        %v734 = vld [vmem:[%s730 + $0x18] sm:$0xff]
        %v736 = vsel %vm408, %v722, 0
        %v739 = vsel %vm408, %v723, 0
        %v742 = vsel %vm408, %v724, 0
        %v745 = vsel %vm408, %v725, 0
        %v748 = vsel %vm408, %v726, 0
        %v751 = vsel %vm408, %v727, 0
        %v754 = vsel %vm408, %v728, 0
        %v757 = vsel %vm408, %v729, 0
        %759 = vmatprep.subr.mxu0 0.0
        %760 = vmatpush1.msra.mxu0 %v731
        %761 = vmatprep.subr.mxu0 0.0
        %762 = vmatpush1.msra.mxu0 %v732
        %763 = vmatprep.subr.mxu0 0.0
        %764 = vmatpush1.msra.mxu0 %v733
        %765 = vmatprep.subr.mxu0 0.0
        %766 = vmatpush1.msra.mxu0 %v734
        %767 = vmatprep.subr.mxu0 0.0
        %768 = vmatpush1.msra.mxu0 0.0
        %769 = vmatprep.subr.mxu0 0.0
        %770 = vmatpush1.msra.mxu0 0.0
        %771 = vmatprep.subr.mxu0 0.0
        %772 = vmatpush1.msra.mxu0 0.0
        %773 = vmatprep.subr.mxu0 0.0
        %774 = vmatpush1.msra.mxu0 0.0
        %775 = vmatprep.subr.mxu0 0.0
        %776 = vmatpush1.msra.mxu0 0.0
        %777 = vmatprep.subr.mxu0 0.0
        %778 = vmatpush1.msra.mxu0 0.0
        %779 = vmatprep.subr.mxu0 0.0
        %780 = vmatpush1.msra.mxu0 0.0
        %781 = vmatprep.subr.mxu0 0.0
        %782 = vmatpush1.msra.mxu0 0.0
        %783 = vmatprep.subr.mxu0 0.0
        %784 = vmatpush1.msra.mxu0 0.0
        %785 = vmatprep.subr.mxu0 0.0
        %786 = vmatpush1.msra.mxu0 0.0
        %787 = vmatprep.subr.mxu0 0.0
        %788 = vmatpush1.msra.mxu0 0.0
        %789 = vmatprep.subr.mxu0 0.0
        %790 = vmatpush1.msra.mxu0 0.0
        %791 = vmatprep.subr.mxu0 0.0
        %792 = vmatpush1.msra.mxu0 0.0
        %793 = vmatprep.subr.mxu0 0.0
        %794 = vmatpush1.msra.mxu0 0.0
        %795 = vmatprep.subr.mxu0 0.0
        %796 = vmatpush1.msra.mxu0 0.0
        %797 = vmatprep.subr.mxu0 0.0
        %798 = vmatpush1.msra.mxu0 0.0
        %799 = vmatprep.subr.mxu0 0.0
        %800 = vmatpush1.msra.mxu0 0.0
        %801 = vmatprep.subr.mxu0 0.0
        %802 = vmatpush1.msra.mxu0 0.0
        %803 = vmatprep.subr.mxu0 0.0
        %804 = vmatpush1.msra.mxu0 0.0
        %805 = vmatprep.subr.mxu0 0.0
        %806 = vmatpush1.msra.mxu0 0.0
        %807 = vmatprep.subr.mxu0 0.0
        %808 = vmatpush1.msra.mxu0 0.0
        %809 = vmatprep.subr.mxu0 0.0
        %810 = vmatpush1.msra.mxu0 0.0
        %811 = vmatprep.subr.mxu0 0.0
        %812 = vmatpush1.msra.mxu0 0.0
        %813 = vmatprep.subr.mxu0 0.0
        %814 = vmatpush1.msra.mxu0 0.0
        %815 = vmatprep.subr.mxu0 0.0
        %816 = vmatpush1.msra.mxu0 0.0
        %817 = vmatprep.subr.mxu0 0.0
        %818 = vmatpush1.msra.mxu0 0.0
        %819 = vmatprep.subr.mxu0 0.0
        %820 = vmatpush1.msra.mxu0 0.0
        %821 = vmatprep.subr.mxu0 0.0
        %822 = vmatpush1.msra.mxu0 0.0
        %823 = vmatprep.mubr.f32.mxu0 0.0
        %824 = vmatmul.mubr.f32.gmra.mrb[0].mxu0 %v736
        %v825 = vpop.f32.mrb[0].mxu0
        %v826 = vadd.f32 0.0, %v825
        %v827 = vpop.f32.mrb[0].mxu0
        %828 = vmatprep.mubr.f32.mxu0 0.0
        %829 = vmatmul.mubr.f32.gmra.mrb[0].mxu0 %v739
        %v830 = vpop.f32.mrb[0].mxu0
        %v831 = vadd.f32 0.0, %v830
        %v832 = vpop.f32.mrb[0].mxu0
        %833 = vmatprep.mubr.f32.mxu0 0.0
        %834 = vmatmul.mubr.f32.gmra.mrb[0].mxu0 %v742
        %v835 = vpop.f32.mrb[0].mxu0
        %v836 = vadd.f32 0.0, %v835
        %v837 = vpop.f32.mrb[0].mxu0
        %838 = vmatprep.mubr.f32.mxu0 0.0
        %839 = vmatmul.mubr.f32.gmra.mrb[0].mxu0 %v745
        %v840 = vpop.f32.mrb[0].mxu0
        %v841 = vadd.f32 0.0, %v840
        %v842 = vpop.f32.mrb[0].mxu0
        %843 = vmatprep.mubr.f32.mxu0 0.0
        %844 = vmatmul.mubr.f32.gmra.mrb[0].mxu0 %v748
        %v845 = vpop.f32.mrb[0].mxu0
        %v846 = vadd.f32 0.0, %v845
        %v847 = vpop.f32.mrb[0].mxu0
        %848 = vmatprep.mubr.f32.mxu0 0.0
        %849 = vmatmul.mubr.f32.gmra.mrb[0].mxu0 %v751
        %v850 = vpop.f32.mrb[0].mxu0
        %v851 = vadd.f32 0.0, %v850
        %v852 = vpop.f32.mrb[0].mxu0
        %853 = vmatprep.mubr.f32.mxu0 0.0
        %854 = vmatmul.mubr.f32.gmra.mrb[0].mxu0 %v754
        %v855 = vpop.f32.mrb[0].mxu0
        %v856 = vadd.f32 0.0, %v855
        %v857 = vpop.f32.mrb[0].mxu0
        %858 = vmatprep.mubr.f32.mxu0 0.0
        %859 = vmatmul.mubr.f32.gmra.mrb[0].mxu0 %v757
        %v860 = vpop.f32.mrb[0].mxu0
        %v861 = vadd.f32 0.0, %v860
        %v862 = vpop.f32.mrb[0].mxu0
        %863 = vdwg.mxu0
        %v864 = vadd.f32 %v684, %v826
        %v865 = vadd.f32 %v689, %v831
        %v866 = vadd.f32 %v694, %v836
        %v867 = vadd.f32 %v699, %v841
        %v868 = vadd.f32 %v704, %v846
        %v869 = vadd.f32 %v709, %v851
        %v870 = vadd.f32 %v714, %v856
        %v871 = vadd.f32 %v719, %v861
        %v872 = vld [vmem:[%s430] sm:$0xff]
        %v873 = vld [vmem:[%s430 + $0x10] sm:$0xff]
        %v874 = vld [vmem:[%s430 + $0x20] sm:$0xff]
        %v875 = vld [vmem:[%s430 + $0x30] sm:$0xff]
        %v876 = vld [vmem:[%s430 + $0x40] sm:$0xff]
        %v877 = vld [vmem:[%s430 + $0x50] sm:$0xff]
        %v878 = vld [vmem:[%s430 + $0x60] sm:$0xff]
        %v879 = vld [vmem:[%s430 + $0x70] sm:$0xff]
        %s880 = scalar_lea.vmem %s3, 96
        %v881 = vld [vmem:[%s880] sm:$0xff]
        %v882 = vld [vmem:[%s880 + $0x8] sm:$0xff]
        %v883 = vld [vmem:[%s880 + $0x10] sm:$0xff]
        %v884 = vld [vmem:[%s880 + $0x18] sm:$0xff]
        %v886 = vsel %vm408, %v872, 0
        %v889 = vsel %vm408, %v873, 0
        %v892 = vsel %vm408, %v874, 0
        %v895 = vsel %vm408, %v875, 0
        %v898 = vsel %vm408, %v876, 0
        %v901 = vsel %vm408, %v877, 0
        %v904 = vsel %vm408, %v878, 0
        %v907 = vsel %vm408, %v879, 0
        %909 = vmatprep.subr.mxu0 0.0
        %910 = vmatpush1.msra.mxu0 %v881
        %911 = vmatprep.subr.mxu0 0.0
        %912 = vmatpush1.msra.mxu0 %v882
        %913 = vmatprep.subr.mxu0 0.0
        %914 = vmatpush1.msra.mxu0 %v883
        %915 = vmatprep.subr.mxu0 0.0
        %916 = vmatpush1.msra.mxu0 %v884
        %917 = vmatprep.subr.mxu0 0.0
        %918 = vmatpush1.msra.mxu0 0.0
        %919 = vmatprep.subr.mxu0 0.0
        %920 = vmatpush1.msra.mxu0 0.0
        %921 = vmatprep.subr.mxu0 0.0
        %922 = vmatpush1.msra.mxu0 0.0
        %923 = vmatprep.subr.mxu0 0.0
        %924 = vmatpush1.msra.mxu0 0.0
        %925 = vmatprep.subr.mxu0 0.0
        %926 = vmatpush1.msra.mxu0 0.0
        %927 = vmatprep.subr.mxu0 0.0
        %928 = vmatpush1.msra.mxu0 0.0
        %929 = vmatprep.subr.mxu0 0.0
        %930 = vmatpush1.msra.mxu0 0.0
        %931 = vmatprep.subr.mxu0 0.0
        %932 = vmatpush1.msra.mxu0 0.0
        %933 = vmatprep.subr.mxu0 0.0
        %934 = vmatpush1.msra.mxu0 0.0
        %935 = vmatprep.subr.mxu0 0.0
        %936 = vmatpush1.msra.mxu0 0.0
        %937 = vmatprep.subr.mxu0 0.0
        %938 = vmatpush1.msra.mxu0 0.0
        %939 = vmatprep.subr.mxu0 0.0
        %940 = vmatpush1.msra.mxu0 0.0
        %941 = vmatprep.subr.mxu0 0.0
        %942 = vmatpush1.msra.mxu0 0.0
        %943 = vmatprep.subr.mxu0 0.0
        %944 = vmatpush1.msra.mxu0 0.0
        %945 = vmatprep.subr.mxu0 0.0
        %946 = vmatpush1.msra.mxu0 0.0
        %947 = vmatprep.subr.mxu0 0.0
        %948 = vmatpush1.msra.mxu0 0.0
        %949 = vmatprep.subr.mxu0 0.0
        %950 = vmatpush1.msra.mxu0 0.0
        %951 = vmatprep.subr.mxu0 0.0
        %952 = vmatpush1.msra.mxu0 0.0
        %953 = vmatprep.subr.mxu0 0.0
        %954 = vmatpush1.msra.mxu0 0.0
        %955 = vmatprep.subr.mxu0 0.0
        %956 = vmatpush1.msra.mxu0 0.0
        %957 = vmatprep.subr.mxu0 0.0
        %958 = vmatpush1.msra.mxu0 0.0
        %959 = vmatprep.subr.mxu0 0.0
        %960 = vmatpush1.msra.mxu0 0.0
        %961 = vmatprep.subr.mxu0 0.0
        %962 = vmatpush1.msra.mxu0 0.0
        %963 = vmatprep.subr.mxu0 0.0
        %964 = vmatpush1.msra.mxu0 0.0
        %965 = vmatprep.subr.mxu0 0.0
        %966 = vmatpush1.msra.mxu0 0.0
        %967 = vmatprep.subr.mxu0 0.0
        %968 = vmatpush1.msra.mxu0 0.0
        %969 = vmatprep.subr.mxu0 0.0
        %970 = vmatpush1.msra.mxu0 0.0
        %971 = vmatprep.subr.mxu0 0.0
        %972 = vmatpush1.msra.mxu0 0.0
        %973 = vmatprep.mubr.f32.mxu0 0.0
        %974 = vmatmul.mubr.f32.gmra.mrb[0].mxu0 %v886
        %v975 = vpop.f32.mrb[0].mxu0
        %v976 = vadd.f32 0.0, %v975
        %v977 = vpop.f32.mrb[0].mxu0
        %978 = vmatprep.mubr.f32.mxu0 0.0
        %979 = vmatmul.mubr.f32.gmra.mrb[0].mxu0 %v889
        %v980 = vpop.f32.mrb[0].mxu0
        %v981 = vadd.f32 0.0, %v980
        %v982 = vpop.f32.mrb[0].mxu0
        %983 = vmatprep.mubr.f32.mxu0 0.0
        %984 = vmatmul.mubr.f32.gmra.mrb[0].mxu0 %v892
        %v985 = vpop.f32.mrb[0].mxu0
        %v986 = vadd.f32 0.0, %v985
        %v987 = vpop.f32.mrb[0].mxu0
        %988 = vmatprep.mubr.f32.mxu0 0.0
        %989 = vmatmul.mubr.f32.gmra.mrb[0].mxu0 %v895
        %v990 = vpop.f32.mrb[0].mxu0
        %v991 = vadd.f32 0.0, %v990
        %v992 = vpop.f32.mrb[0].mxu0
        %993 = vmatprep.mubr.f32.mxu0 0.0
        %994 = vmatmul.mubr.f32.gmra.mrb[0].mxu0 %v898
        %v995 = vpop.f32.mrb[0].mxu0
        %v996 = vadd.f32 0.0, %v995
        %v997 = vpop.f32.mrb[0].mxu0
        %998 = vmatprep.mubr.f32.mxu0 0.0
        %999 = vmatmul.mubr.f32.gmra.mrb[0].mxu0 %v901
        %v1000 = vpop.f32.mrb[0].mxu0
        %v1001 = vadd.f32 0.0, %v1000
        %v1002 = vpop.f32.mrb[0].mxu0
        %1003 = vmatprep.mubr.f32.mxu0 0.0
        %1004 = vmatmul.mubr.f32.gmra.mrb[0].mxu0 %v904
        %v1005 = vpop.f32.mrb[0].mxu0
        %v1006 = vadd.f32 0.0, %v1005
        %v1007 = vpop.f32.mrb[0].mxu0
        %1008 = vmatprep.mubr.f32.mxu0 0.0
        %1009 = vmatmul.mubr.f32.gmra.mrb[0].mxu0 %v907
        %v1010 = vpop.f32.mrb[0].mxu0
        %v1011 = vadd.f32 0.0, %v1010
        %v1012 = vpop.f32.mrb[0].mxu0
        %1013 = vdwg.mxu0
        %v1014 = vadd.f32 %v864, %v976
        %v1015 = vadd.f32 %v865, %v981
        %v1016 = vadd.f32 %v866, %v986
        %v1017 = vadd.f32 %v867, %v991
        %v1018 = vadd.f32 %v868, %v996
        %v1019 = vadd.f32 %v869, %v1001
        %v1020 = vadd.f32 %v870, %v1006
        %v1021 = vadd.f32 %v871, %v1011
        %v1022 = vld [vmem:[%s430 + $0x1] sm:$0xff]
        %v1023 = vld [vmem:[%s430 + $0x11] sm:$0xff]
        %v1024 = vld [vmem:[%s430 + $0x21] sm:$0xff]
        %v1025 = vld [vmem:[%s430 + $0x31] sm:$0xff]
        %v1026 = vld [vmem:[%s430 + $0x41] sm:$0xff]
        %v1027 = vld [vmem:[%s430 + $0x51] sm:$0xff]
        %v1028 = vld [vmem:[%s430 + $0x61] sm:$0xff]
        %v1029 = vld [vmem:[%s430 + $0x71] sm:$0xff]
        %s1030 = scalar_lea.vmem %s3, 128
        %v1031 = vld [vmem:[%s1030] sm:$0xff]
        %v1032 = vld [vmem:[%s1030 + $0x8] sm:$0xff]
        %v1033 = vld [vmem:[%s1030 + $0x10] sm:$0xff]
        %v1034 = vld [vmem:[%s1030 + $0x18] sm:$0xff]
        %v1036 = vsel %vm408, %v1022, 0
        %v1039 = vsel %vm408, %v1023, 0
        %v1042 = vsel %vm408, %v1024, 0
        %v1045 = vsel %vm408, %v1025, 0
        %v1048 = vsel %vm408, %v1026, 0
        %v1051 = vsel %vm408, %v1027, 0
        %v1054 = vsel %vm408, %v1028, 0
        %v1057 = vsel %vm408, %v1029, 0
        %1059 = vmatprep.subr.mxu0 0.0
        %1060 = vmatpush1.msra.mxu0 %v1031
        %1061 = vmatprep.subr.mxu0 0.0
        %1062 = vmatpush1.msra.mxu0 %v1032
        %1063 = vmatprep.subr.mxu0 0.0
        %1064 = vmatpush1.msra.mxu0 %v1033
        %1065 = vmatprep.subr.mxu0 0.0
        %1066 = vmatpush1.msra.mxu0 %v1034
        %1067 = vmatprep.subr.mxu0 0.0
        %1068 = vmatpush1.msra.mxu0 0.0
        %1069 = vmatprep.subr.mxu0 0.0
        %1070 = vmatpush1.msra.mxu0 0.0
        %1071 = vmatprep.subr.mxu0 0.0
        %1072 = vmatpush1.msra.mxu0 0.0
        %1073 = vmatprep.subr.mxu0 0.0
        %1074 = vmatpush1.msra.mxu0 0.0
        %1075 = vmatprep.subr.mxu0 0.0
        %1076 = vmatpush1.msra.mxu0 0.0
        %1077 = vmatprep.subr.mxu0 0.0
        %1078 = vmatpush1.msra.mxu0 0.0
        %1079 = vmatprep.subr.mxu0 0.0
        %1080 = vmatpush1.msra.mxu0 0.0
        %1081 = vmatprep.subr.mxu0 0.0
        %1082 = vmatpush1.msra.mxu0 0.0
        %1083 = vmatprep.subr.mxu0 0.0
        %1084 = vmatpush1.msra.mxu0 0.0
        %1085 = vmatprep.subr.mxu0 0.0
        %1086 = vmatpush1.msra.mxu0 0.0
        %1087 = vmatprep.subr.mxu0 0.0
        %1088 = vmatpush1.msra.mxu0 0.0
        %1089 = vmatprep.subr.mxu0 0.0
        %1090 = vmatpush1.msra.mxu0 0.0
        %1091 = vmatprep.subr.mxu0 0.0
        %1092 = vmatpush1.msra.mxu0 0.0
        %1093 = vmatprep.subr.mxu0 0.0
        %1094 = vmatpush1.msra.mxu0 0.0
        %1095 = vmatprep.subr.mxu0 0.0
        %1096 = vmatpush1.msra.mxu0 0.0
        %1097 = vmatprep.subr.mxu0 0.0
        %1098 = vmatpush1.msra.mxu0 0.0
        %1099 = vmatprep.subr.mxu0 0.0
        %1100 = vmatpush1.msra.mxu0 0.0
        %1101 = vmatprep.subr.mxu0 0.0
        %1102 = vmatpush1.msra.mxu0 0.0
        %1103 = vmatprep.subr.mxu0 0.0
        %1104 = vmatpush1.msra.mxu0 0.0
        %1105 = vmatprep.subr.mxu0 0.0
        %1106 = vmatpush1.msra.mxu0 0.0
        %1107 = vmatprep.subr.mxu0 0.0
        %1108 = vmatpush1.msra.mxu0 0.0
        %1109 = vmatprep.subr.mxu0 0.0
        %1110 = vmatpush1.msra.mxu0 0.0
        %1111 = vmatprep.subr.mxu0 0.0
        %1112 = vmatpush1.msra.mxu0 0.0
        %1113 = vmatprep.subr.mxu0 0.0
        %1114 = vmatpush1.msra.mxu0 0.0
        %1115 = vmatprep.subr.mxu0 0.0
        %1116 = vmatpush1.msra.mxu0 0.0
        %1117 = vmatprep.subr.mxu0 0.0
        %1118 = vmatpush1.msra.mxu0 0.0
        %1119 = vmatprep.subr.mxu0 0.0
        %1120 = vmatpush1.msra.mxu0 0.0
        %1121 = vmatprep.subr.mxu0 0.0
        %1122 = vmatpush1.msra.mxu0 0.0
        %1123 = vmatprep.mubr.f32.mxu0 0.0
        %1124 = vmatmul.mubr.f32.gmra.mrb[0].mxu0 %v1036
        %v1125 = vpop.f32.mrb[0].mxu0
        %v1126 = vadd.f32 0.0, %v1125
        %v1127 = vpop.f32.mrb[0].mxu0
        %1128 = vmatprep.mubr.f32.mxu0 0.0
        %1129 = vmatmul.mubr.f32.gmra.mrb[0].mxu0 %v1039
        %v1130 = vpop.f32.mrb[0].mxu0
        %v1131 = vadd.f32 0.0, %v1130
        %v1132 = vpop.f32.mrb[0].mxu0
        %1133 = vmatprep.mubr.f32.mxu0 0.0
        %1134 = vmatmul.mubr.f32.gmra.mrb[0].mxu0 %v1042
        %v1135 = vpop.f32.mrb[0].mxu0
        %v1136 = vadd.f32 0.0, %v1135
        %v1137 = vpop.f32.mrb[0].mxu0
        %1138 = vmatprep.mubr.f32.mxu0 0.0
        %1139 = vmatmul.mubr.f32.gmra.mrb[0].mxu0 %v1045
        %v1140 = vpop.f32.mrb[0].mxu0
        %v1141 = vadd.f32 0.0, %v1140
        %v1142 = vpop.f32.mrb[0].mxu0
        %1143 = vmatprep.mubr.f32.mxu0 0.0
        %1144 = vmatmul.mubr.f32.gmra.mrb[0].mxu0 %v1048
        %v1145 = vpop.f32.mrb[0].mxu0
        %v1146 = vadd.f32 0.0, %v1145
        %v1147 = vpop.f32.mrb[0].mxu0
        %1148 = vmatprep.mubr.f32.mxu0 0.0
        %1149 = vmatmul.mubr.f32.gmra.mrb[0].mxu0 %v1051
        %v1150 = vpop.f32.mrb[0].mxu0
        %v1151 = vadd.f32 0.0, %v1150
        %v1152 = vpop.f32.mrb[0].mxu0
        %1153 = vmatprep.mubr.f32.mxu0 0.0
        %1154 = vmatmul.mubr.f32.gmra.mrb[0].mxu0 %v1054
        %v1155 = vpop.f32.mrb[0].mxu0
        %v1156 = vadd.f32 0.0, %v1155
        %v1157 = vpop.f32.mrb[0].mxu0
        %1158 = vmatprep.mubr.f32.mxu0 0.0
        %1159 = vmatmul.mubr.f32.gmra.mrb[0].mxu0 %v1057
        %v1160 = vpop.f32.mrb[0].mxu0
        %v1161 = vadd.f32 0.0, %v1160
        %v1162 = vpop.f32.mrb[0].mxu0
        %1163 = vdwg.mxu0
        %v1164 = vadd.f32 %v1014, %v1126
        %v1165 = vadd.f32 %v1015, %v1131
        %v1166 = vadd.f32 %v1016, %v1136
        %v1167 = vadd.f32 %v1017, %v1141
        %v1168 = vadd.f32 %v1018, %v1146
        %v1169 = vadd.f32 %v1019, %v1151
        %v1170 = vadd.f32 %v1020, %v1156
        %v1171 = vadd.f32 %v1021, %v1161
        %v1172 = vld [vmem:[%s430 + $0x2] sm:$0xff]
        %v1173 = vld [vmem:[%s430 + $0x12] sm:$0xff]
        %v1174 = vld [vmem:[%s430 + $0x22] sm:$0xff]
        %v1175 = vld [vmem:[%s430 + $0x32] sm:$0xff]
        %v1176 = vld [vmem:[%s430 + $0x42] sm:$0xff]
        %v1177 = vld [vmem:[%s430 + $0x52] sm:$0xff]
        %v1178 = vld [vmem:[%s430 + $0x62] sm:$0xff]
        %v1179 = vld [vmem:[%s430 + $0x72] sm:$0xff]
        %s1180 = scalar_lea.vmem %s3, 160
        %v1181 = vld [vmem:[%s1180] sm:$0xff]
        %v1182 = vld [vmem:[%s1180 + $0x8] sm:$0xff]
        %v1183 = vld [vmem:[%s1180 + $0x10] sm:$0xff]
        %v1184 = vld [vmem:[%s1180 + $0x18] sm:$0xff]
        %v1186 = vsel %vm408, %v1172, 0
        %v1189 = vsel %vm408, %v1173, 0
        %v1192 = vsel %vm408, %v1174, 0
        %v1195 = vsel %vm408, %v1175, 0
        %v1198 = vsel %vm408, %v1176, 0
        %v1201 = vsel %vm408, %v1177, 0
        %v1204 = vsel %vm408, %v1178, 0
        %v1207 = vsel %vm408, %v1179, 0
        %1209 = vmatprep.subr.mxu0 0.0
        %1210 = vmatpush1.msra.mxu0 %v1181
        %1211 = vmatprep.subr.mxu0 0.0
        %1212 = vmatpush1.msra.mxu0 %v1182
        %1213 = vmatprep.subr.mxu0 0.0
        %1214 = vmatpush1.msra.mxu0 %v1183
        %1215 = vmatprep.subr.mxu0 0.0
        %1216 = vmatpush1.msra.mxu0 %v1184
        %1217 = vmatprep.subr.mxu0 0.0
        %1218 = vmatpush1.msra.mxu0 0.0
        %1219 = vmatprep.subr.mxu0 0.0
        %1220 = vmatpush1.msra.mxu0 0.0
        %1221 = vmatprep.subr.mxu0 0.0
        %1222 = vmatpush1.msra.mxu0 0.0
        %1223 = vmatprep.subr.mxu0 0.0
        %1224 = vmatpush1.msra.mxu0 0.0
        %1225 = vmatprep.subr.mxu0 0.0
        %1226 = vmatpush1.msra.mxu0 0.0
        %1227 = vmatprep.subr.mxu0 0.0
        %1228 = vmatpush1.msra.mxu0 0.0
        %1229 = vmatprep.subr.mxu0 0.0
        %1230 = vmatpush1.msra.mxu0 0.0
        %1231 = vmatprep.subr.mxu0 0.0
        %1232 = vmatpush1.msra.mxu0 0.0
        %1233 = vmatprep.subr.mxu0 0.0
        %1234 = vmatpush1.msra.mxu0 0.0
        %1235 = vmatprep.subr.mxu0 0.0
        %1236 = vmatpush1.msra.mxu0 0.0
        %1237 = vmatprep.subr.mxu0 0.0
        %1238 = vmatpush1.msra.mxu0 0.0
        %1239 = vmatprep.subr.mxu0 0.0
        %1240 = vmatpush1.msra.mxu0 0.0
        %1241 = vmatprep.subr.mxu0 0.0
        %1242 = vmatpush1.msra.mxu0 0.0
        %1243 = vmatprep.subr.mxu0 0.0
        %1244 = vmatpush1.msra.mxu0 0.0
        %1245 = vmatprep.subr.mxu0 0.0
        %1246 = vmatpush1.msra.mxu0 0.0
        %1247 = vmatprep.subr.mxu0 0.0
        %1248 = vmatpush1.msra.mxu0 0.0
        %1249 = vmatprep.subr.mxu0 0.0
        %1250 = vmatpush1.msra.mxu0 0.0
        %1251 = vmatprep.subr.mxu0 0.0
        %1252 = vmatpush1.msra.mxu0 0.0
        %1253 = vmatprep.subr.mxu0 0.0
        %1254 = vmatpush1.msra.mxu0 0.0
        %1255 = vmatprep.subr.mxu0 0.0
        %1256 = vmatpush1.msra.mxu0 0.0
        %1257 = vmatprep.subr.mxu0 0.0
        %1258 = vmatpush1.msra.mxu0 0.0
        %1259 = vmatprep.subr.mxu0 0.0
        %1260 = vmatpush1.msra.mxu0 0.0
        %1261 = vmatprep.subr.mxu0 0.0
        %1262 = vmatpush1.msra.mxu0 0.0
        %1263 = vmatprep.subr.mxu0 0.0
        %1264 = vmatpush1.msra.mxu0 0.0
        %1265 = vmatprep.subr.mxu0 0.0
        %1266 = vmatpush1.msra.mxu0 0.0
        %1267 = vmatprep.subr.mxu0 0.0
        %1268 = vmatpush1.msra.mxu0 0.0
        %1269 = vmatprep.subr.mxu0 0.0
        %1270 = vmatpush1.msra.mxu0 0.0
        %1271 = vmatprep.subr.mxu0 0.0
        %1272 = vmatpush1.msra.mxu0 0.0
        %1273 = vmatprep.mubr.f32.mxu0 0.0
        %1274 = vmatmul.mubr.f32.gmra.mrb[0].mxu0 %v1186
        %v1275 = vpop.f32.mrb[0].mxu0
        %v1276 = vadd.f32 0.0, %v1275
        %v1277 = vpop.f32.mrb[0].mxu0
        %1278 = vmatprep.mubr.f32.mxu0 0.0
        %1279 = vmatmul.mubr.f32.gmra.mrb[0].mxu0 %v1189
        %v1280 = vpop.f32.mrb[0].mxu0
        %v1281 = vadd.f32 0.0, %v1280
        %v1282 = vpop.f32.mrb[0].mxu0
        %1283 = vmatprep.mubr.f32.mxu0 0.0
        %1284 = vmatmul.mubr.f32.gmra.mrb[0].mxu0 %v1192
        %v1285 = vpop.f32.mrb[0].mxu0
        %v1286 = vadd.f32 0.0, %v1285
        %v1287 = vpop.f32.mrb[0].mxu0
        %1288 = vmatprep.mubr.f32.mxu0 0.0
        %1289 = vmatmul.mubr.f32.gmra.mrb[0].mxu0 %v1195
        %v1290 = vpop.f32.mrb[0].mxu0
        %v1291 = vadd.f32 0.0, %v1290
        %v1292 = vpop.f32.mrb[0].mxu0
        %1293 = vmatprep.mubr.f32.mxu0 0.0
        %1294 = vmatmul.mubr.f32.gmra.mrb[0].mxu0 %v1198
        %v1295 = vpop.f32.mrb[0].mxu0
        %v1296 = vadd.f32 0.0, %v1295
        %v1297 = vpop.f32.mrb[0].mxu0
        %1298 = vmatprep.mubr.f32.mxu0 0.0
        %1299 = vmatmul.mubr.f32.gmra.mrb[0].mxu0 %v1201
        %v1300 = vpop.f32.mrb[0].mxu0
        %v1301 = vadd.f32 0.0, %v1300
        %v1302 = vpop.f32.mrb[0].mxu0
        %1303 = vmatprep.mubr.f32.mxu0 0.0
        %1304 = vmatmul.mubr.f32.gmra.mrb[0].mxu0 %v1204
        %v1305 = vpop.f32.mrb[0].mxu0
        %v1306 = vadd.f32 0.0, %v1305
        %v1307 = vpop.f32.mrb[0].mxu0
        %1308 = vmatprep.mubr.f32.mxu0 0.0
        %1309 = vmatmul.mubr.f32.gmra.mrb[0].mxu0 %v1207
        %v1310 = vpop.f32.mrb[0].mxu0
        %v1311 = vadd.f32 0.0, %v1310
        %v1312 = vpop.f32.mrb[0].mxu0
        %1313 = vdwg.mxu0
        %v1314 = vadd.f32 %v1164, %v1276
        %v1315 = vadd.f32 %v1165, %v1281
        %v1316 = vadd.f32 %v1166, %v1286
        %v1317 = vadd.f32 %v1167, %v1291
        %v1318 = vadd.f32 %v1168, %v1296
        %v1319 = vadd.f32 %v1169, %v1301
        %v1320 = vadd.f32 %v1170, %v1306
        %v1321 = vadd.f32 %v1171, %v1311
        %s1322 = scalar_lea.vmem [#allocation2], 32
        %v1323 = vld [vmem:[%s1322] sm:$0xff]
        %v1324 = vld [vmem:[%s1322 + $0x10] sm:$0xff]
        %v1325 = vld [vmem:[%s1322 + $0x20] sm:$0xff]
        %v1326 = vld [vmem:[%s1322 + $0x30] sm:$0xff]
        %v1327 = vld [vmem:[%s1322 + $0x40] sm:$0xff]
        %v1328 = vld [vmem:[%s1322 + $0x50] sm:$0xff]
        %v1329 = vld [vmem:[%s1322 + $0x60] sm:$0xff]
        %v1330 = vld [vmem:[%s1322 + $0x70] sm:$0xff]
        %s1331 = scalar_lea.vmem %s3, 192
        %v1332 = vld [vmem:[%s1331] sm:$0xff]
        %v1333 = vld [vmem:[%s1331 + $0x8] sm:$0xff]
        %v1334 = vld [vmem:[%s1331 + $0x10] sm:$0xff]
        %v1335 = vld [vmem:[%s1331 + $0x18] sm:$0xff]
        %v1337 = vsel %vm408, %v1323, 0
        %v1340 = vsel %vm408, %v1324, 0
        %v1343 = vsel %vm408, %v1325, 0
        %v1346 = vsel %vm408, %v1326, 0
        %v1349 = vsel %vm408, %v1327, 0
        %v1352 = vsel %vm408, %v1328, 0
        %v1355 = vsel %vm408, %v1329, 0
        %v1358 = vsel %vm408, %v1330, 0
        %1360 = vmatprep.subr.mxu0 0.0
        %1361 = vmatpush1.msra.mxu0 %v1332
        %1362 = vmatprep.subr.mxu0 0.0
        %1363 = vmatpush1.msra.mxu0 %v1333
        %1364 = vmatprep.subr.mxu0 0.0
        %1365 = vmatpush1.msra.mxu0 %v1334
        %1366 = vmatprep.subr.mxu0 0.0
        %1367 = vmatpush1.msra.mxu0 %v1335
        %1368 = vmatprep.subr.mxu0 0.0
        %1369 = vmatpush1.msra.mxu0 0.0
        %1370 = vmatprep.subr.mxu0 0.0
        %1371 = vmatpush1.msra.mxu0 0.0
        %1372 = vmatprep.subr.mxu0 0.0
        %1373 = vmatpush1.msra.mxu0 0.0
        %1374 = vmatprep.subr.mxu0 0.0
        %1375 = vmatpush1.msra.mxu0 0.0
        %1376 = vmatprep.subr.mxu0 0.0
        %1377 = vmatpush1.msra.mxu0 0.0
        %1378 = vmatprep.subr.mxu0 0.0
        %1379 = vmatpush1.msra.mxu0 0.0
        %1380 = vmatprep.subr.mxu0 0.0
        %1381 = vmatpush1.msra.mxu0 0.0
        %1382 = vmatprep.subr.mxu0 0.0
        %1383 = vmatpush1.msra.mxu0 0.0
        %1384 = vmatprep.subr.mxu0 0.0
        %1385 = vmatpush1.msra.mxu0 0.0
        %1386 = vmatprep.subr.mxu0 0.0
        %1387 = vmatpush1.msra.mxu0 0.0
        %1388 = vmatprep.subr.mxu0 0.0
        %1389 = vmatpush1.msra.mxu0 0.0
        %1390 = vmatprep.subr.mxu0 0.0
        %1391 = vmatpush1.msra.mxu0 0.0
        %1392 = vmatprep.subr.mxu0 0.0
        %1393 = vmatpush1.msra.mxu0 0.0
        %1394 = vmatprep.subr.mxu0 0.0
        %1395 = vmatpush1.msra.mxu0 0.0
        %1396 = vmatprep.subr.mxu0 0.0
        %1397 = vmatpush1.msra.mxu0 0.0
        %1398 = vmatprep.subr.mxu0 0.0
        %1399 = vmatpush1.msra.mxu0 0.0
        %1400 = vmatprep.subr.mxu0 0.0
        %1401 = vmatpush1.msra.mxu0 0.0
        %1402 = vmatprep.subr.mxu0 0.0
        %1403 = vmatpush1.msra.mxu0 0.0
        %1404 = vmatprep.subr.mxu0 0.0
        %1405 = vmatpush1.msra.mxu0 0.0
        %1406 = vmatprep.subr.mxu0 0.0
        %1407 = vmatpush1.msra.mxu0 0.0
        %1408 = vmatprep.subr.mxu0 0.0
        %1409 = vmatpush1.msra.mxu0 0.0
        %1410 = vmatprep.subr.mxu0 0.0
        %1411 = vmatpush1.msra.mxu0 0.0
        %1412 = vmatprep.subr.mxu0 0.0
        %1413 = vmatpush1.msra.mxu0 0.0
        %1414 = vmatprep.subr.mxu0 0.0
        %1415 = vmatpush1.msra.mxu0 0.0
        %1416 = vmatprep.subr.mxu0 0.0
        %1417 = vmatpush1.msra.mxu0 0.0
        %1418 = vmatprep.subr.mxu0 0.0
        %1419 = vmatpush1.msra.mxu0 0.0
        %1420 = vmatprep.subr.mxu0 0.0
        %1421 = vmatpush1.msra.mxu0 0.0
        %1422 = vmatprep.subr.mxu0 0.0
        %1423 = vmatpush1.msra.mxu0 0.0
        %1424 = vmatprep.mubr.f32.mxu0 0.0
        %1425 = vmatmul.mubr.f32.gmra.mrb[0].mxu0 %v1337
        %v1426 = vpop.f32.mrb[0].mxu0
        %v1427 = vadd.f32 0.0, %v1426
        %v1428 = vpop.f32.mrb[0].mxu0
        %1429 = vmatprep.mubr.f32.mxu0 0.0
        %1430 = vmatmul.mubr.f32.gmra.mrb[0].mxu0 %v1340
        %v1431 = vpop.f32.mrb[0].mxu0
        %v1432 = vadd.f32 0.0, %v1431
        %v1433 = vpop.f32.mrb[0].mxu0
        %1434 = vmatprep.mubr.f32.mxu0 0.0
        %1435 = vmatmul.mubr.f32.gmra.mrb[0].mxu0 %v1343
        %v1436 = vpop.f32.mrb[0].mxu0
        %v1437 = vadd.f32 0.0, %v1436
        %v1438 = vpop.f32.mrb[0].mxu0
        %1439 = vmatprep.mubr.f32.mxu0 0.0
        %1440 = vmatmul.mubr.f32.gmra.mrb[0].mxu0 %v1346
        %v1441 = vpop.f32.mrb[0].mxu0
        %v1442 = vadd.f32 0.0, %v1441
        %v1443 = vpop.f32.mrb[0].mxu0
        %1444 = vmatprep.mubr.f32.mxu0 0.0
        %1445 = vmatmul.mubr.f32.gmra.mrb[0].mxu0 %v1349
        %v1446 = vpop.f32.mrb[0].mxu0
        %v1447 = vadd.f32 0.0, %v1446
        %v1448 = vpop.f32.mrb[0].mxu0
        %1449 = vmatprep.mubr.f32.mxu0 0.0
        %1450 = vmatmul.mubr.f32.gmra.mrb[0].mxu0 %v1352
        %v1451 = vpop.f32.mrb[0].mxu0
        %v1452 = vadd.f32 0.0, %v1451
        %v1453 = vpop.f32.mrb[0].mxu0
        %1454 = vmatprep.mubr.f32.mxu0 0.0
        %1455 = vmatmul.mubr.f32.gmra.mrb[0].mxu0 %v1355
        %v1456 = vpop.f32.mrb[0].mxu0
        %v1457 = vadd.f32 0.0, %v1456
        %v1458 = vpop.f32.mrb[0].mxu0
        %1459 = vmatprep.mubr.f32.mxu0 0.0
        %1460 = vmatmul.mubr.f32.gmra.mrb[0].mxu0 %v1358
        %v1461 = vpop.f32.mrb[0].mxu0
        %v1462 = vadd.f32 0.0, %v1461
        %v1463 = vpop.f32.mrb[0].mxu0
        %1464 = vdwg.mxu0
        %v1465 = vadd.f32 %v1314, %v1427
        %v1466 = vadd.f32 %v1315, %v1432
        %v1467 = vadd.f32 %v1316, %v1437
        %v1468 = vadd.f32 %v1317, %v1442
        %v1469 = vadd.f32 %v1318, %v1447
        %v1470 = vadd.f32 %v1319, %v1452
        %v1471 = vadd.f32 %v1320, %v1457
        %v1472 = vadd.f32 %v1321, %v1462
        %v1473 = vld [vmem:[%s1322 + $0x1] sm:$0xff]
        %v1474 = vld [vmem:[%s1322 + $0x11] sm:$0xff]
        %v1475 = vld [vmem:[%s1322 + $0x21] sm:$0xff]
        %v1476 = vld [vmem:[%s1322 + $0x31] sm:$0xff]
        %v1477 = vld [vmem:[%s1322 + $0x41] sm:$0xff]
        %v1478 = vld [vmem:[%s1322 + $0x51] sm:$0xff]
        %v1479 = vld [vmem:[%s1322 + $0x61] sm:$0xff]
        %v1480 = vld [vmem:[%s1322 + $0x71] sm:$0xff]
        %s1481 = scalar_lea.vmem %s3, 224
        %v1482 = vld [vmem:[%s1481] sm:$0xff]
        %v1483 = vld [vmem:[%s1481 + $0x8] sm:$0xff]
        %v1484 = vld [vmem:[%s1481 + $0x10] sm:$0xff]
        %v1485 = vld [vmem:[%s1481 + $0x18] sm:$0xff]
        %v1487 = vsel %vm408, %v1473, 0
        %v1490 = vsel %vm408, %v1474, 0
        %v1493 = vsel %vm408, %v1475, 0
        %v1496 = vsel %vm408, %v1476, 0
        %v1499 = vsel %vm408, %v1477, 0
        %v1502 = vsel %vm408, %v1478, 0
        %v1505 = vsel %vm408, %v1479, 0
        %v1508 = vsel %vm408, %v1480, 0
        %1510 = vmatprep.subr.mxu0 0.0
        %1511 = vmatpush1.msra.mxu0 %v1482
        %1512 = vmatprep.subr.mxu0 0.0
        %1513 = vmatpush1.msra.mxu0 %v1483
        %1514 = vmatprep.subr.mxu0 0.0
        %1515 = vmatpush1.msra.mxu0 %v1484
        %1516 = vmatprep.subr.mxu0 0.0
        %1517 = vmatpush1.msra.mxu0 %v1485
        %1518 = vmatprep.subr.mxu0 0.0
        %1519 = vmatpush1.msra.mxu0 0.0
        %1520 = vmatprep.subr.mxu0 0.0
        %1521 = vmatpush1.msra.mxu0 0.0
        %1522 = vmatprep.subr.mxu0 0.0
        %1523 = vmatpush1.msra.mxu0 0.0
        %1524 = vmatprep.subr.mxu0 0.0
        %1525 = vmatpush1.msra.mxu0 0.0
        %1526 = vmatprep.subr.mxu0 0.0
        %1527 = vmatpush1.msra.mxu0 0.0
        %1528 = vmatprep.subr.mxu0 0.0
        %1529 = vmatpush1.msra.mxu0 0.0
        %1530 = vmatprep.subr.mxu0 0.0
        %1531 = vmatpush1.msra.mxu0 0.0
        %1532 = vmatprep.subr.mxu0 0.0
        %1533 = vmatpush1.msra.mxu0 0.0
        %1534 = vmatprep.subr.mxu0 0.0
        %1535 = vmatpush1.msra.mxu0 0.0
        %1536 = vmatprep.subr.mxu0 0.0
        %1537 = vmatpush1.msra.mxu0 0.0
        %1538 = vmatprep.subr.mxu0 0.0
        %1539 = vmatpush1.msra.mxu0 0.0
        %1540 = vmatprep.subr.mxu0 0.0
        %1541 = vmatpush1.msra.mxu0 0.0
        %1542 = vmatprep.subr.mxu0 0.0
        %1543 = vmatpush1.msra.mxu0 0.0
        %1544 = vmatprep.subr.mxu0 0.0
        %1545 = vmatpush1.msra.mxu0 0.0
        %1546 = vmatprep.subr.mxu0 0.0
        %1547 = vmatpush1.msra.mxu0 0.0
        %1548 = vmatprep.subr.mxu0 0.0
        %1549 = vmatpush1.msra.mxu0 0.0
        %1550 = vmatprep.subr.mxu0 0.0
        %1551 = vmatpush1.msra.mxu0 0.0
        %1552 = vmatprep.subr.mxu0 0.0
        %1553 = vmatpush1.msra.mxu0 0.0
        %1554 = vmatprep.subr.mxu0 0.0
        %1555 = vmatpush1.msra.mxu0 0.0
        %1556 = vmatprep.subr.mxu0 0.0
        %1557 = vmatpush1.msra.mxu0 0.0
        %1558 = vmatprep.subr.mxu0 0.0
        %1559 = vmatpush1.msra.mxu0 0.0
        %1560 = vmatprep.subr.mxu0 0.0
        %1561 = vmatpush1.msra.mxu0 0.0
        %1562 = vmatprep.subr.mxu0 0.0
        %1563 = vmatpush1.msra.mxu0 0.0
        %1564 = vmatprep.subr.mxu0 0.0
        %1565 = vmatpush1.msra.mxu0 0.0
        %1566 = vmatprep.subr.mxu0 0.0
        %1567 = vmatpush1.msra.mxu0 0.0
        %1568 = vmatprep.subr.mxu0 0.0
        %1569 = vmatpush1.msra.mxu0 0.0
        %1570 = vmatprep.subr.mxu0 0.0
        %1571 = vmatpush1.msra.mxu0 0.0
        %1572 = vmatprep.subr.mxu0 0.0
        %1573 = vmatpush1.msra.mxu0 0.0
        %1574 = vmatprep.mubr.f32.mxu0 0.0
        %1575 = vmatmul.mubr.f32.gmra.mrb[0].mxu0 %v1487
        %v1576 = vpop.f32.mrb[0].mxu0
        %v1577 = vadd.f32 0.0, %v1576
        %v1578 = vpop.f32.mrb[0].mxu0
        %1579 = vmatprep.mubr.f32.mxu0 0.0
        %1580 = vmatmul.mubr.f32.gmra.mrb[0].mxu0 %v1490
        %v1581 = vpop.f32.mrb[0].mxu0
        %v1582 = vadd.f32 0.0, %v1581
        %v1583 = vpop.f32.mrb[0].mxu0
        %1584 = vmatprep.mubr.f32.mxu0 0.0
        %1585 = vmatmul.mubr.f32.gmra.mrb[0].mxu0 %v1493
        %v1586 = vpop.f32.mrb[0].mxu0
        %v1587 = vadd.f32 0.0, %v1586
        %v1588 = vpop.f32.mrb[0].mxu0
        %1589 = vmatprep.mubr.f32.mxu0 0.0
        %1590 = vmatmul.mubr.f32.gmra.mrb[0].mxu0 %v1496
        %v1591 = vpop.f32.mrb[0].mxu0
        %v1592 = vadd.f32 0.0, %v1591
        %v1593 = vpop.f32.mrb[0].mxu0
        %1594 = vmatprep.mubr.f32.mxu0 0.0
        %1595 = vmatmul.mubr.f32.gmra.mrb[0].mxu0 %v1499
        %v1596 = vpop.f32.mrb[0].mxu0
        %v1597 = vadd.f32 0.0, %v1596
        %v1598 = vpop.f32.mrb[0].mxu0
        %1599 = vmatprep.mubr.f32.mxu0 0.0
        %1600 = vmatmul.mubr.f32.gmra.mrb[0].mxu0 %v1502
        %v1601 = vpop.f32.mrb[0].mxu0
        %v1602 = vadd.f32 0.0, %v1601
        %v1603 = vpop.f32.mrb[0].mxu0
        %1604 = vmatprep.mubr.f32.mxu0 0.0
        %1605 = vmatmul.mubr.f32.gmra.mrb[0].mxu0 %v1505
        %v1606 = vpop.f32.mrb[0].mxu0
        %v1607 = vadd.f32 0.0, %v1606
        %v1608 = vpop.f32.mrb[0].mxu0
        %1609 = vmatprep.mubr.f32.mxu0 0.0
        %1610 = vmatmul.mubr.f32.gmra.mrb[0].mxu0 %v1508
        %v1611 = vpop.f32.mrb[0].mxu0
        %v1612 = vadd.f32 0.0, %v1611
        %v1613 = vpop.f32.mrb[0].mxu0
        %1614 = vdwg.mxu0
        %v1615 = vadd.f32 %v1465, %v1577
        %v1616 = vadd.f32 %v1466, %v1582
        %v1617 = vadd.f32 %v1467, %v1587
        %v1618 = vadd.f32 %v1468, %v1592
        %v1619 = vadd.f32 %v1469, %v1597
        %v1620 = vadd.f32 %v1470, %v1602
        %v1621 = vadd.f32 %v1471, %v1607
        %v1622 = vadd.f32 %v1472, %v1612
        %v1623 = vld [vmem:[%s1322 + $0x2] sm:$0xff]
        %v1624 = vld [vmem:[%s1322 + $0x12] sm:$0xff]
        %v1625 = vld [vmem:[%s1322 + $0x22] sm:$0xff]
        %v1626 = vld [vmem:[%s1322 + $0x32] sm:$0xff]
        %v1627 = vld [vmem:[%s1322 + $0x42] sm:$0xff]
        %v1628 = vld [vmem:[%s1322 + $0x52] sm:$0xff]
        %v1629 = vld [vmem:[%s1322 + $0x62] sm:$0xff]
        %v1630 = vld [vmem:[%s1322 + $0x72] sm:$0xff]
        %s1631 = scalar_lea.vmem %s3, 256
        %v1632 = vld [vmem:[%s1631] sm:$0xff]
        %v1633 = vld [vmem:[%s1631 + $0x8] sm:$0xff]
        %v1634 = vld [vmem:[%s1631 + $0x10] sm:$0xff]
        %v1635 = vld [vmem:[%s1631 + $0x18] sm:$0xff]
        %v1637 = vsel %vm408, %v1623, 0
        %v1640 = vsel %vm408, %v1624, 0
        %v1643 = vsel %vm408, %v1625, 0
        %v1646 = vsel %vm408, %v1626, 0
        %v1649 = vsel %vm408, %v1627, 0
        %v1652 = vsel %vm408, %v1628, 0
        %v1655 = vsel %vm408, %v1629, 0
        %v1658 = vsel %vm408, %v1630, 0
        %1660 = vmatprep.subr.mxu0 0.0
        %1661 = vmatpush1.msra.mxu0 %v1632
        %1662 = vmatprep.subr.mxu0 0.0
        %1663 = vmatpush1.msra.mxu0 %v1633
        %1664 = vmatprep.subr.mxu0 0.0
        %1665 = vmatpush1.msra.mxu0 %v1634
        %1666 = vmatprep.subr.mxu0 0.0
        %1667 = vmatpush1.msra.mxu0 %v1635
        %1668 = vmatprep.subr.mxu0 0.0
        %1669 = vmatpush1.msra.mxu0 0.0
        %1670 = vmatprep.subr.mxu0 0.0
        %1671 = vmatpush1.msra.mxu0 0.0
        %1672 = vmatprep.subr.mxu0 0.0
        %1673 = vmatpush1.msra.mxu0 0.0
        %1674 = vmatprep.subr.mxu0 0.0
        %1675 = vmatpush1.msra.mxu0 0.0
        %1676 = vmatprep.subr.mxu0 0.0
        %1677 = vmatpush1.msra.mxu0 0.0
        %1678 = vmatprep.subr.mxu0 0.0
        %1679 = vmatpush1.msra.mxu0 0.0
        %1680 = vmatprep.subr.mxu0 0.0
        %1681 = vmatpush1.msra.mxu0 0.0
        %1682 = vmatprep.subr.mxu0 0.0
        %1683 = vmatpush1.msra.mxu0 0.0
        %1684 = vmatprep.subr.mxu0 0.0
        %1685 = vmatpush1.msra.mxu0 0.0
        %1686 = vmatprep.subr.mxu0 0.0
        %1687 = vmatpush1.msra.mxu0 0.0
        %1688 = vmatprep.subr.mxu0 0.0
        %1689 = vmatpush1.msra.mxu0 0.0
        %1690 = vmatprep.subr.mxu0 0.0
        %1691 = vmatpush1.msra.mxu0 0.0
        %1692 = vmatprep.subr.mxu0 0.0
        %1693 = vmatpush1.msra.mxu0 0.0
        %1694 = vmatprep.subr.mxu0 0.0
        %1695 = vmatpush1.msra.mxu0 0.0
        %1696 = vmatprep.subr.mxu0 0.0
        %1697 = vmatpush1.msra.mxu0 0.0
        %1698 = vmatprep.subr.mxu0 0.0
        %1699 = vmatpush1.msra.mxu0 0.0
        %1700 = vmatprep.subr.mxu0 0.0
        %1701 = vmatpush1.msra.mxu0 0.0
        %1702 = vmatprep.subr.mxu0 0.0
        %1703 = vmatpush1.msra.mxu0 0.0
        %1704 = vmatprep.subr.mxu0 0.0
        %1705 = vmatpush1.msra.mxu0 0.0
        %1706 = vmatprep.subr.mxu0 0.0
        %1707 = vmatpush1.msra.mxu0 0.0
        %1708 = vmatprep.subr.mxu0 0.0
        %1709 = vmatpush1.msra.mxu0 0.0
        %1710 = vmatprep.subr.mxu0 0.0
        %1711 = vmatpush1.msra.mxu0 0.0
        %1712 = vmatprep.subr.mxu0 0.0
        %1713 = vmatpush1.msra.mxu0 0.0
        %1714 = vmatprep.subr.mxu0 0.0
        %1715 = vmatpush1.msra.mxu0 0.0
        %1716 = vmatprep.subr.mxu0 0.0
        %1717 = vmatpush1.msra.mxu0 0.0
        %1718 = vmatprep.subr.mxu0 0.0
        %1719 = vmatpush1.msra.mxu0 0.0
        %1720 = vmatprep.subr.mxu0 0.0
        %1721 = vmatpush1.msra.mxu0 0.0
        %1722 = vmatprep.subr.mxu0 0.0
        %1723 = vmatpush1.msra.mxu0 0.0
        %1724 = vmatprep.mubr.f32.mxu0 0.0
        %1725 = vmatmul.mubr.f32.gmra.mrb[0].mxu0 %v1637
        %v1726 = vpop.f32.mrb[0].mxu0
        %v1727 = vadd.f32 0.0, %v1726
        %v1728 = vpop.f32.mrb[0].mxu0
        %1729 = vmatprep.mubr.f32.mxu0 0.0
        %1730 = vmatmul.mubr.f32.gmra.mrb[0].mxu0 %v1640
        %v1731 = vpop.f32.mrb[0].mxu0
        %v1732 = vadd.f32 0.0, %v1731
        %v1733 = vpop.f32.mrb[0].mxu0
        %1734 = vmatprep.mubr.f32.mxu0 0.0
        %1735 = vmatmul.mubr.f32.gmra.mrb[0].mxu0 %v1643
        %v1736 = vpop.f32.mrb[0].mxu0
        %v1737 = vadd.f32 0.0, %v1736
        %v1738 = vpop.f32.mrb[0].mxu0
        %1739 = vmatprep.mubr.f32.mxu0 0.0
        %1740 = vmatmul.mubr.f32.gmra.mrb[0].mxu0 %v1646
        %v1741 = vpop.f32.mrb[0].mxu0
        %v1742 = vadd.f32 0.0, %v1741
        %v1743 = vpop.f32.mrb[0].mxu0
        %1744 = vmatprep.mubr.f32.mxu0 0.0
        %1745 = vmatmul.mubr.f32.gmra.mrb[0].mxu0 %v1649
        %v1746 = vpop.f32.mrb[0].mxu0
        %v1747 = vadd.f32 0.0, %v1746
        %v1748 = vpop.f32.mrb[0].mxu0
        %1749 = vmatprep.mubr.f32.mxu0 0.0
        %1750 = vmatmul.mubr.f32.gmra.mrb[0].mxu0 %v1652
        %v1751 = vpop.f32.mrb[0].mxu0
        %v1752 = vadd.f32 0.0, %v1751
        %v1753 = vpop.f32.mrb[0].mxu0
        %1754 = vmatprep.mubr.f32.mxu0 0.0
        %1755 = vmatmul.mubr.f32.gmra.mrb[0].mxu0 %v1655
        %v1756 = vpop.f32.mrb[0].mxu0
        %v1757 = vadd.f32 0.0, %v1756
        %v1758 = vpop.f32.mrb[0].mxu0
        %1759 = vmatprep.mubr.f32.mxu0 0.0
        %1760 = vmatmul.mubr.f32.gmra.mrb[0].mxu0 %v1658
        %v1761 = vpop.f32.mrb[0].mxu0
        %v1762 = vadd.f32 0.0, %v1761
        %v1763 = vpop.f32.mrb[0].mxu0
        %1764 = vdwg.mxu0
        %v1765 = vadd.f32 %v1615, %v1727
        %v1766 = vadd.f32 %v1616, %v1732
        %v1767 = vadd.f32 %v1617, %v1737
        %v1768 = vadd.f32 %v1618, %v1742
        %v1769 = vadd.f32 %v1619, %v1747
        %v1770 = vadd.f32 %v1620, %v1752
        %v1771 = vadd.f32 %v1621, %v1757
        %v1772 = vadd.f32 %v1622, %v1762
        %v1773 = vld [vmem:[%s4] sm:$0x1]
        %v1775 = vlaneseq
        %v1776 = vshrl.u32 %v1775, 7
        %v1777 = vsub.s32 0, %v1776
        %v1778 = vrot.slane %v1773, %v1777
        %v1780 = vadd.f32 %v1765, %v1778
        %v1781 = vadd.f32 %v1766, %v1778
        %v1782 = vadd.f32 %v1767, %v1778
        %v1783 = vadd.f32 %v1768, %v1778
        %v1784 = vadd.f32 %v1769, %v1778
        %v1785 = vadd.f32 %v1770, %v1778
        %v1786 = vadd.f32 %v1771, %v1778
        %v1787 = vadd.f32 %v1772, %v1778
        %v1788 = vmax.f32 %v1780, 0.0
        %v1789 = vmax.f32 %v1781, 0.0
        %v1790 = vmax.f32 %v1782, 0.0
        %v1791 = vmax.f32 %v1783, 0.0
        %v1792 = vmax.f32 %v1784, 0.0
        %v1793 = vmax.f32 %v1785, 0.0
        %v1794 = vmax.f32 %v1786, 0.0
        %v1795 = vmax.f32 %v1787, 0.0
        %v1796 = vld [vmem:[%s5] sm:$0xff]
        %v1797 = vld [vmem:[%s5 + $0x8] sm:$0xff]
        %v1798 = vld [vmem:[%s5 + $0x10] sm:$0xff]
        %v1799 = vld [vmem:[%s5 + $0x18] sm:$0xff]
        %v1800 = vld [vmem:[%s5 + $0x20] sm:$0xff]
        %v1801 = vld [vmem:[%s5 + $0x28] sm:$0xff]
        %v1802 = vld [vmem:[%s5 + $0x30] sm:$0xff]
        %v1803 = vld [vmem:[%s5 + $0x38] sm:$0xff]
        %1805 = vset.pattern.permute.xlu0 0
        %1806 = vperm.xlu0 %1805, %v1796
        %v1807 = vpop.permute.xlu0 %1806
        %1810 = vset.pattern.permute.xlu0 0
        %1811 = vperm.xlu0 %1810, %v1797
        %v1812 = vpop.permute.xlu0 %1811
        %1815 = vset.pattern.permute.xlu0 0
        %1816 = vperm.xlu0 %1815, %v1798
        %v1817 = vpop.permute.xlu0 %1816
        %1820 = vset.pattern.permute.xlu0 0
        %1821 = vperm.xlu0 %1820, %v1799
        %v1822 = vpop.permute.xlu0 %1821
        %1825 = vset.pattern.permute.xlu0 0
        %1826 = vperm.xlu0 %1825, %v1800
        %v1827 = vpop.permute.xlu0 %1826
        %1830 = vset.pattern.permute.xlu0 0
        %1831 = vperm.xlu0 %1830, %v1801
        %v1832 = vpop.permute.xlu0 %1831
        %1835 = vset.pattern.permute.xlu0 0
        %1836 = vperm.xlu0 %1835, %v1802
        %v1837 = vpop.permute.xlu0 %1836
        %1840 = vset.pattern.permute.xlu0 0
        %1841 = vperm.xlu0 %1840, %v1803
        %v1842 = vpop.permute.xlu0 %1841
        %v1844 = vmul.f32 %v1788, %v1807
        %v1845 = vmul.f32 %v1789, %v1812
        %v1846 = vmul.f32 %v1790, %v1817
        %v1847 = vmul.f32 %v1791, %v1822
        %v1848 = vmul.f32 %v1792, %v1827
        %v1849 = vmul.f32 %v1793, %v1832
        %v1850 = vmul.f32 %v1794, %v1837
        %v1851 = vmul.f32 %v1795, %v1842
        %vm1852 = vcmask 523264
        %v1853 = vsel %vm1852, %v1844, 0.0
        %v1854 = vsel %vm1852, %v1845, 0.0
        %v1855 = vadd.f32 %v1853, %v1854
        %v1856 = vsel %vm1852, %v1846, 0.0
        %v1857 = vadd.f32 %v1855, %v1856
        %v1858 = vsel %vm1852, %v1847, 0.0
        %v1859 = vadd.f32 %v1857, %v1858
        %v1860 = vsel %vm1852, %v1848, 0.0
        %v1861 = vadd.f32 %v1859, %v1860
        %v1862 = vsel %vm1852, %v1849, 0.0
        %v1863 = vadd.f32 %v1861, %v1862
        %v1864 = vsel %vm1852, %v1850, 0.0
        %v1865 = vadd.f32 %v1863, %v1864
        %v1866 = vsel %vm1852, %v1851, 0.0
        %v1867 = vadd.f32 %v1865, %v1866
        %v1868 = vrot.slane %v1867, 4
        %v1869 = vadd.f32 %v1867, %v1868
        %v1870 = vrot.slane %v1869, 2
        %v1871 = vadd.f32 %v1869, %v1870
        %v1872 = vrot.slane %v1871, 1
        %v1873 = vadd.f32 %v1871, %v1872
        %vm1874 = vcmask 516096
        %1875 = vst.msk [vmem:[%s243] sm:$0x1] %vm1874, %v1873
        %s1876 = sand.u32 %s159, 1
        %s1877 = scalar_lea.sflag [#allocation4], %s1876
        %s1878 = sand.u32 %s159, 1
        %s1879 = scalar_lea.vmem [#allocation3], %s1878
        // Predicated region
        $region45: #{scratch_cnn_forward.1} parent=43 // pred_check
          %p1880 = pneg %p169
        $region46: #{scratch_cnn_forward.1} parent=43 // pred_check_branch
          %1882 = sbr.rel (%p1880) target = $region48
        $region47: #{scratch_cnn_forward.1} parent=43 // pred_region
          %s1884 = ssub.s32 16, 16
          %1885 = vsyncadd %s1877, %s1884
          %s1886 = smul.addr %s20, 16
          %s1887 = scalar_lea.hbm %s6, %s1886
          %s1889 = sshll.u32 %s1879, 4
          %s1890 = int_to_ptr.vmem [resolvable:$true] %s1889
          %1892 = dma.vmem_to_hbm [thread:$0]  %s1890, 16, %s1887, %s1877
        $region48: #{scratch_cnn_forward.1} parent=43 // pred_fallthru
          _
      $region44: #{scratch_cnn_forward.1} parent=5 // pred_fallthru
        _
      %p1893 = scmp.le.s32.totalorder 2, %s15
      // Predicated region
      $region49: #{scratch_cnn_forward.1} parent=5 // pred_check
        %p1894 = pneg %p1893
      $region50: #{scratch_cnn_forward.1} parent=5 // pred_check_branch
        %1896 = sbr.rel (%p1894) target = $region52
      $region51: #{scratch_cnn_forward.1} parent=5 // pred_region
        %s1897 = ssub.s32 %s15, 2
        // Predicated region
        $region53: #{scratch_cnn_forward.1} parent=51 // pred_check
          %p1898 = pneg %p175
        $region54: #{scratch_cnn_forward.1} parent=51 // pred_check_branch
          %1900 = sbr.rel (%p1898) target = $region56
        $region55: #{scratch_cnn_forward.1} parent=51 // pred_region
          %s1901 = sand.u32 %s160, 1
          %s1902 = scalar_lea.sflag [#allocation4], %s1901
          %s1903 = sand.u32 %s160, 1
          %s1904 = scalar_lea.vmem [#allocation3], %s1903
          %1905 = dma.done %s1902, 16
        $region56: #{scratch_cnn_forward.1} parent=51 // pred_fallthru
          _
      $region52: #{scratch_cnn_forward.1} parent=5 // pred_fallthru
        _
    $region6: #{scratch_cnn_forward.1} parent=1 // loop_footer
      %s19 = sadd.s32 1, %s15
    $region7: #{scratch_cnn_forward.1} parent=1 // loop_footer_branch
      %14 = sbr.rel target = $region3
    $region8: #{scratch_cnn_forward.1} parent=1 // loop_exit
      _
    %1906 = vsyncpa [#allocation4], 1
    %s1907 = scalar_lea.sflag [#allocation4], 1
    %1908 = vsyncpa %s1907, 1

</llo_original>
